<compile_context>
chip_gen: v7x
topology: tpu7x:2x2x1
jax: 0.10.0
libtpu: 0.0.40
codegen_flags: <defaults>
</compile_context>

<pallas_src>
import jax
import jax.numpy as jnp
from jax.experimental import pallas as pl
from jax.experimental.pallas import tpu as pltpu

BN_EPS = 1e-5


def up_conv_condconv_forward(x, params, *, compute_dtype=jnp.bfloat16,
                             out_dtype=jnp.float32):
    """x: (B, C_in, H0, W0) float32 NCHW. Returns (B, C_out, 2*H0, 2*W0) out_dtype."""
    w_experts = params["w_experts"]      # (E, C_out, C_in, 3, 3)
    conv_b    = params["conv_b"]         # (C_out,)
    fc_w      = params["fc_w"]           # (E, C_in)
    fc_b      = params["fc_b"]           # (E,)
    gamma     = params["bn_gamma"]       # (C_out,)
    beta      = params["bn_beta"]        # (C_out,)
    r_mean    = params["bn_mean"]        # (C_out,)
    r_var     = params["bn_var"]         # (C_out,)

    B, C_in, H0, W0 = x.shape
    E, C_out = w_experts.shape[0], w_experts.shape[1]
    HW0 = H0 * W0
    H, W = 2 * H0, 2 * W0
    assert HW0 % 128 == 0, "flattened original spatial axis must be a multiple of 128"

    # ---- routing pre-reduction (exact): adaptive_avg_pool2d((1,1)) of the
    # nearest-2x upsampled input == mean of the original input.
    pooled = jnp.mean(x.astype(jnp.float32), axis=(2, 3)).reshape(B, C_in, 1)

    # ---- stream the ORIGINAL image, lane-dense (no upsampled slab in HBM).
    x_flat = x.astype(compute_dtype).reshape(B, C_in, HW0)

    # ---- fold BatchNorm (eval) + conv bias:  BN(conv(x) + b) = (s .* K) * x + t
    s = (gamma * jax.lax.rsqrt(r_var + BN_EPS)).astype(jnp.float32)                  # (C_out,)
    tbias = (beta + (conv_b - r_mean) * s).reshape(C_out, 1).astype(jnp.float32)     # (C_out,1)

    # ---- fold the nearest-2x upsample into per-phase 2x2 kernels -------------
    # Output pixel (2Y+py, 2X+px) reads upsampled rows {2Y+py-1, 2Y+py, 2Y+py+1},
    # which collapse onto original rows {Y-1, Y} (py=0) or {Y, Y+1} (py=1); the 3
    # kernel rows combine onto the 2 source rows with the matrices below (same for
    # columns).  Source shift for phase p=(py,px), tap t=(ry,rx): (py+ry-1, px+rx-1).
    wse = w_experts.astype(jnp.float32) * s[None, :, None, None, None]   # (E,Co,Ci,3,3)
    Rm = [jnp.array([[1., 0., 0.], [0., 1., 1.]], jnp.float32),          # parity 0
          jnp.array([[1., 1., 0.], [0., 0., 1.]], jnp.float32)]          # parity 1
    phase_k = []
    for py in range(2):
        for px in range(2):
            wp = jnp.einsum("rk,sl,eoikl->ersoi", Rm[py], Rm[px], wse)   # (E,2,2,Co,Ci)
            phase_k.append(wp.reshape(E, 4, C_out, C_in))
    # (E, 16, C_out, C_in), index p*4 + t with p = 2*py+px, t = 2*ry+rx.
    # Streamed in compute dtype (bf16 default) to halve the largest resident block.
    w_mix = jnp.stack(phase_k, axis=1).reshape(E, 16, C_out, C_in).astype(compute_dtype)

    # ---- per-shift zero-padding masks on the ORIGINAL grid; index (sy+1)*3+(sx+1)
    yy = jnp.arange(H0).reshape(H0, 1)
    xx = jnp.arange(W0).reshape(1, W0)
    masks = []
    for sy in (-1, 0, 1):
        for sx in (-1, 0, 1):
            ok = ((yy + sy >= 0) & (yy + sy < H0) & (xx + sx >= 0) & (xx + sx < W0))
            masks.append(ok.reshape(HW0))
    mask_arr = jnp.stack(masks, axis=0).astype(compute_dtype)            # (9, HW0)

    fc_wc = fc_w.astype(jnp.float32)
    fc_bc = fc_b.reshape(E, 1).astype(jnp.float32)

    def kernel(x_ref, pooled_ref, fcw_ref, fcb_ref, wmix_ref, tb_ref, mask_ref,
               out_ref):
        xv = x_ref[0]                                            # (C_in, HW0)

        # routing: sigmoid(Linear(avg_pool)); Dropout == identity at inference.
        logits = jnp.dot(fcw_ref[...], pooled_ref[0],
                         preferred_element_type=jnp.float32) + fcb_ref[...]
        r = jax.nn.sigmoid(logits)                               # (E, 1) f32

        # expert mixing: bf16-resident weights, f32 accumulation (E is tiny, VPU).
        kern = jnp.zeros((16, C_out, C_in), jnp.float32)
        for e in range(E):
            re = r[e:e + 1, :]                                   # (1, 1)
            kern = kern + re * wmix_ref[e].astype(jnp.float32)   # leading-axis index
        kern = kern.astype(xv.dtype)                             # (16, C_out, C_in)

        # Build the 9 shifted + edge-masked source slabs ONCE (8 rolls, 8 mask
        # multiplies); every phase reuses 4 of them.
        # TODO(synk): for very large C_in*HW0 (v7x, 64 MiB VMEM) add halo-aware row
        # tiling as a second "parallel" grid axis to bound the live slab footprint.
        taps = {}
        for sy in (-1, 0, 1):
            for sx in (-1, 0, 1):
                if sy == 0 and sx == 0:
                    taps[(sy, sx)] = xv                          # center: no shift/mask
                else:
                    shift = (-(sy * W0 + sx)) % HW0              # tap[i] = x[i + sy*W0 + sx]
                    tv = pltpu.roll(xv, shift, axis=1)
                    mi = (sy + 1) * 3 + (sx + 1)
                    taps[(sy, sx)] = tv * mask_ref[mi:mi + 1, :]

        # 4 parity phases, each an effective 2x2 conv = 4 MXU matmuls, f32 accum.
        # TODO(synk): for small C_in on v6e, stack the 4 taps along the contraction
        # axis and issue one (C_out, 4*C_in) matmul per phase.
        for p in range(4):
            py, px = divmod(p, 2)
            acc = jnp.zeros((C_out, HW0), jnp.float32)
            for t in range(4):
                ry, rx = divmod(t, 2)
                tap = taps[(py + ry - 1, px + rx - 1)]
                acc = acc + jnp.dot(kern[p * 4 + t], tap,
                                    preferred_element_type=jnp.float32)
            # fused (BatchNorm + conv-bias) affine + ReLU, phase-major store.
            out_ref[0, p] = jnp.maximum(acc + tb_ref[...], 0.0).astype(out_ref.dtype)

    # ---- VMEM budget from actual resident bytes, clamped per TPU generation ----
    act_b = jnp.dtype(compute_dtype).itemsize
    out_b = jnp.dtype(out_dtype).itemsize
    resident = (
        2 * C_in * HW0 * act_b                 # double-buffered input slab
        + 2 * 4 * C_out * HW0 * out_b          # double-buffered phase-major output
        + 2 * E * 16 * C_out * C_in * act_b    # phase expert weights (grid-invariant)
        + 2 * 9 * HW0 * act_b                  # shift masks
        + 16 * C_out * C_in * (4 + act_b)      # mixed kernel (f32 accum + cast copy)
        + 9 * C_in * HW0 * act_b               # shifted tap slabs live across phases
        + 2 * C_out * HW0 * 4)                 # f32 phase accumulator + matmul temp
    need = int(resident * 1.25) + (2 << 20)
    try:
        cap = pltpu.get_tpu_info().vmem_capacity_bytes   # 128 MiB v5e/v6e, 64 MiB v7x
    except Exception:                                    # conservative fallback
        cap = 64 * 2 ** 20
    vmem_limit = max(32 * 2 ** 20, min(need, cap - 16 * 2 ** 20))
    # TODO(synk): if `need` exceeds the per-generation cap, enable spatial tiling
    # instead of clamping.
    # TODO(synk): mark the grid-invariant inputs (w_mix, masks, fc, tbias) with
    # pipeline_mode=pl.Buffered(1) once validated, to skip their second buffer.

    out = pl.pallas_call(
        kernel,
        out_shape=jax.ShapeDtypeStruct((B, 4, C_out, HW0), out_dtype),
        grid_spec=pltpu.PrefetchScalarGridSpec(
            num_scalar_prefetch=0,
            grid=(B,),
            in_specs=[
                pl.BlockSpec((1, C_in, HW0), lambda b: (b, 0, 0)),           # original slab
                pl.BlockSpec((1, C_in, 1), lambda b: (b, 0, 0)),             # pooled (routing)
                pl.BlockSpec((E, C_in), lambda b: (0, 0)),                   # fc weight
                pl.BlockSpec((E, 1), lambda b: (0, 0)),                      # fc bias
                pl.BlockSpec((E, 16, C_out, C_in), lambda b: (0, 0, 0, 0)),  # phase experts
                pl.BlockSpec((C_out, 1), lambda b: (0, 0)),                  # folded affine bias
                pl.BlockSpec((9, HW0), lambda b: (0, 0)),                    # shift masks
            ],
            out_specs=pl.BlockSpec((1, 4, C_out, HW0), lambda b: (b, 0, 0, 0)),
        ),
        compiler_params=pltpu.CompilerParams(
            dimension_semantics=("parallel",),
            vmem_limit_bytes=vmem_limit,
        ),
    )(x_flat, pooled, fc_wc, fc_bc, w_mix, tbias, mask_arr)

    # cheap interleave of the 4 parity phases back to NCHW (layout plumbing only)
    o = out.reshape(B, 2, 2, C_out, H0, W0)            # (B, py, px, Co, Y, X)
    o = jnp.transpose(o, (0, 3, 4, 1, 5, 2))           # (B, Co, Y, py, X, px)
    return o.reshape(B, C_out, H, W)


def reference_forward(x, params):
    """Pure-JAX reference mirroring the PyTorch forward (eval mode)."""
    w_experts = params["w_experts"]
    conv_b = params["conv_b"]
    fc_w = params["fc_w"]
    fc_b = params["fc_b"]
    B = x.shape[0]
    x_up = jnp.repeat(jnp.repeat(x, 2, axis=2), 2, axis=3)
    outs = []
    for b in range(B):
        xi = x_up[b:b + 1]                                   # (1, C_in, H, W)
        pooled = jnp.mean(xi[0], axis=(1, 2))                # (C_in,)
        r = jax.nn.sigmoid(fc_w @ pooled + fc_b)             # (E,)
        kern = jnp.einsum("e,eoihw->oihw", r, w_experts)     # (C_out, C_in, 3, 3)
        o = jax.lax.conv_general_dilated(
            xi, kern, window_strides=(1, 1), padding=((1, 1), (1, 1)),
            dimension_numbers=("NCHW", "OIHW", "NCHW"))
        outs.append(o + conv_b[None, :, None, None])
    y = jnp.concatenate(outs, axis=0)
    g  = params["bn_gamma"][None, :, None, None]
    bt = params["bn_beta"][None, :, None, None]
    mu = params["bn_mean"][None, :, None, None]
    vr = params["bn_var"][None, :, None, None]
    y = (y - mu) * jax.lax.rsqrt(vr + BN_EPS) * g + bt
    return jnp.maximum(y, 0.0)


if __name__ == "__main__":
    B, C_in, C_out, H0, W0, E = 2, 4, 8, 16, 16, 3
    key = jax.random.PRNGKey(0)
    ks = jax.random.split(key, 9)
    x = jax.random.normal(ks[0], (B, C_in, H0, W0), jnp.float32)
    params = dict(
        w_experts=jax.random.normal(ks[1], (E, C_out, C_in, 3, 3), jnp.float32) * 0.1,
        conv_b=jax.random.normal(ks[2], (C_out,), jnp.float32) * 0.1,
        fc_w=jax.random.normal(ks[3], (E, C_in), jnp.float32) * 0.5,
        fc_b=jax.random.normal(ks[4], (E,), jnp.float32) * 0.1,
        bn_gamma=jax.random.normal(ks[5], (C_out,), jnp.float32) * 0.2 + 1.0,
        bn_beta=jax.random.normal(ks[6], (C_out,), jnp.float32) * 0.1,
        bn_mean=jax.random.normal(ks[7], (C_out,), jnp.float32) * 0.1,
        bn_var=jnp.abs(jax.random.normal(ks[8], (C_out,), jnp.float32)) * 0.5 + 0.5,
    )

    y_ref = jax.block_until_ready(reference_forward(x, params))

    # f32 path: tight check of the phase decomposition against the reference
    y32 = jax.block_until_ready(
        up_conv_condconv_forward(x, params, compute_dtype=jnp.float32))
    assert y32.shape == (B, C_out, 2 * H0, 2 * W0), y32.shape
    err32 = float(jnp.max(jnp.abs(y32 - y_ref)))
    if err32 > 2e-3:
        raise AssertionError(f"f32 kernel/reference mismatch: max abs err = {err32}")

    # bf16 path (default): bf16 activations + weights, f32 mixing/accumulation
    ybf = jax.block_until_ready(up_conv_condconv_forward(x, params))
    assert ybf.shape == (B, C_out, 2 * H0, 2 * W0), ybf.shape
    errbf = float(jnp.max(jnp.abs(ybf - y_ref)))
    if errbf > 4e-2:   # accepted bf16 precision tradeoff, not a correctness bound
        raise AssertionError(f"bf16 kernel/reference mismatch: max abs err = {errbf}")

    print("KERNEL_OK")
</pallas_src>

<mosaic_0001>
module attributes {stable_mosaic.version = 11 : i64} {
  func.func @kernel(%arg0: i32, %arg1: memref<1x4x256xf32, #tpu.memory_space<vmem>>, %arg2: memref<1x4x1xf32, #tpu.memory_space<vmem>>, %arg3: memref<3x4xf32, #tpu.memory_space<vmem>>, %arg4: memref<3x1xf32, #tpu.memory_space<vmem>>, %arg5: memref<3x16x8x4xf32, #tpu.memory_space<vmem>>, %arg6: memref<8x1xf32, #tpu.memory_space<vmem>>, %arg7: memref<9x256xf32, #tpu.memory_space<vmem>>, %arg8: memref<1x4x8x256xf32, #tpu.memory_space<vmem>>) attributes {dimension_semantics = [#tpu.dimension_semantics<parallel>], iteration_bounds = array<i64: 2>, scalar_prefetch = 0 : i64, scratch_operands = 0 : i64, tpu.core_type = #tpu.core_type<tc>, window_params = [{transform_indices = @transform_0, window_bounds = array<i64: 1, 4, 256>}, {transform_indices = @transform_1, window_bounds = array<i64: 1, 4, 1>}, {pipeline_mode = #tpu.pipeline_mode<synchronous>, transform_indices = @transform_2, window_bounds = array<i64: 3, 4>}, {pipeline_mode = #tpu.pipeline_mode<synchronous>, transform_indices = @transform_3, window_bounds = array<i64: 3, 1>}, {pipeline_mode = #tpu.pipeline_mode<synchronous>, transform_indices = @transform_4, window_bounds = array<i64: 3, 16, 8, 4>}, {pipeline_mode = #tpu.pipeline_mode<synchronous>, transform_indices = @transform_5, window_bounds = array<i64: 8, 1>}, {pipeline_mode = #tpu.pipeline_mode<synchronous>, transform_indices = @transform_6, window_bounds = array<i64: 9, 256>}, {transform_indices = @transform_7, window_bounds = array<i64: 1, 4, 8, 256>}]} {
    %c0 = arith.constant 0 : index
    %c0_0 = arith.constant 0 : index
    %c0_1 = arith.constant 0 : index
    %0 = vector.load %arg1[%c0, %c0_0, %c0_1] : memref<1x4x256xf32, #tpu.memory_space<vmem>>, vector<1x4x256xf32>
    %1 = vector.shape_cast %0 : vector<1x4x256xf32> to vector<4x256xf32>
    %c0_2 = arith.constant 0 : index
    %c0_3 = arith.constant 0 : index
    %2 = vector.load %arg3[%c0_2, %c0_3] : memref<3x4xf32, #tpu.memory_space<vmem>>, vector<3x4xf32>
    %c0_4 = arith.constant 0 : index
    %c0_5 = arith.constant 0 : index
    %c0_6 = arith.constant 0 : index
    %3 = vector.load %arg2[%c0_4, %c0_5, %c0_6] : memref<1x4x1xf32, #tpu.memory_space<vmem>>, vector<1x4x1xf32>
    %4 = vector.shape_cast %3 : vector<1x4x1xf32> to vector<4x1xf32>
    %cst = arith.constant dense<0.000000e+00> : vector<3x1xf32>
    %5 = tpu.matmul %2, %4, %cst {dimension_numbers = #tpu.dot_dimension_numbers<[1], [0], [0], [1], [0, 0, 1, 1], [], []>} : vector<3x4xf32>, vector<4x1xf32>, vector<3x1xf32> -> vector<3x1xf32>
    %c0_7 = arith.constant 0 : index
    %c0_8 = arith.constant 0 : index
    %6 = vector.load %arg4[%c0_7, %c0_8] : memref<3x1xf32, #tpu.memory_space<vmem>>, vector<3x1xf32>
    %7 = arith.addf %5, %6 : vector<3x1xf32>
    %8 = arith.negf %7 : vector<3x1xf32>
    %9 = math.exp %8 : vector<3x1xf32>
    %cst_9 = arith.constant 1.000000e+00 : f32
    %10 = vector.broadcast %cst_9 : f32 to vector<3x1xf32>
    %11 = arith.addf %10, %9 : vector<3x1xf32>
    %12 = arith.divf %10, %11 : vector<3x1xf32>
    %cst_10 = arith.constant 0.000000e+00 : f32
    %13 = vector.broadcast %cst_10 : f32 to vector<16x8x4xf32>
    %14 = vector.extract_strided_slice %12 {offsets = [0, 0], sizes = [1, 1], strides = [1, 1]} : vector<3x1xf32> to vector<1x1xf32>
    %c0_11 = arith.constant 0 : index
    %c0_12 = arith.constant 0 : index
    %c0_13 = arith.constant 0 : index
    %c0_14 = arith.constant 0 : index
    %15 = vector.load %arg5[%c0_11, %c0_12, %c0_13, %c0_14] : memref<3x16x8x4xf32, #tpu.memory_space<vmem>>, vector<1x16x8x4xf32>
    %16 = vector.shape_cast %15 : vector<1x16x8x4xf32> to vector<16x8x4xf32>
    %17 = vector.shape_cast %14 : vector<1x1xf32> to vector<1x1x1xf32>
    %18 = vector.broadcast %17 : vector<1x1x1xf32> to vector<16x8x4xf32>
    %19 = arith.mulf %18, %16 : vector<16x8x4xf32>
    %20 = arith.addf %13, %19 : vector<16x8x4xf32>
    %21 = vector.extract_strided_slice %12 {offsets = [1, 0], sizes = [1, 1], strides = [1, 1]} : vector<3x1xf32> to vector<1x1xf32>
    %c1 = arith.constant 1 : index
    %c0_15 = arith.constant 0 : index
    %c0_16 = arith.constant 0 : index
    %c0_17 = arith.constant 0 : index
    %22 = vector.load %arg5[%c1, %c0_15, %c0_16, %c0_17] : memref<3x16x8x4xf32, #tpu.memory_space<vmem>>, vector<1x16x8x4xf32>
    %23 = vector.shape_cast %22 : vector<1x16x8x4xf32> to vector<16x8x4xf32>
    %24 = vector.shape_cast %21 : vector<1x1xf32> to vector<1x1x1xf32>
    %25 = vector.broadcast %24 : vector<1x1x1xf32> to vector<16x8x4xf32>
    %26 = arith.mulf %25, %23 : vector<16x8x4xf32>
    %27 = arith.addf %20, %26 : vector<16x8x4xf32>
    %28 = vector.extract_strided_slice %12 {offsets = [2, 0], sizes = [1, 1], strides = [1, 1]} : vector<3x1xf32> to vector<1x1xf32>
    %c2 = arith.constant 2 : index
    %c0_18 = arith.constant 0 : index
    %c0_19 = arith.constant 0 : index
    %c0_20 = arith.constant 0 : index
    %29 = vector.load %arg5[%c2, %c0_18, %c0_19, %c0_20] : memref<3x16x8x4xf32, #tpu.memory_space<vmem>>, vector<1x16x8x4xf32>
    %30 = vector.shape_cast %29 : vector<1x16x8x4xf32> to vector<16x8x4xf32>
    %31 = vector.shape_cast %28 : vector<1x1xf32> to vector<1x1x1xf32>
    %32 = vector.broadcast %31 : vector<1x1x1xf32> to vector<16x8x4xf32>
    %33 = arith.mulf %32, %30 : vector<16x8x4xf32>
    %34 = arith.addf %27, %33 : vector<16x8x4xf32>
    %c17_i32 = arith.constant 17 : i32
    %35 = tpu.dynamic_rotate %1 by %c17_i32 dim 1 : vector<4x256xf32>, i32 -> vector<4x256xf32>
    %c0_21 = arith.constant 0 : index
    %c0_22 = arith.constant 0 : index
    %36 = vector.load %arg7[%c0_21, %c0_22] : memref<9x256xf32, #tpu.memory_space<vmem>>, vector<1x256xf32>
    %37 = vector.broadcast %36 : vector<1x256xf32> to vector<4x256xf32>
    %38 = arith.mulf %35, %37 : vector<4x256xf32>
    %c16_i32 = arith.constant 16 : i32
    %39 = tpu.dynamic_rotate %1 by %c16_i32 dim 1 : vector<4x256xf32>, i32 -> vector<4x256xf32>
    %c1_23 = arith.constant 1 : index
    %c0_24 = arith.constant 0 : index
    %40 = vector.load %arg7[%c1_23, %c0_24] : memref<9x256xf32, #tpu.memory_space<vmem>>, vector<1x256xf32>
    %41 = vector.broadcast %40 : vector<1x256xf32> to vector<4x256xf32>
    %42 = arith.mulf %39, %41 : vector<4x256xf32>
    %c15_i32 = arith.constant 15 : i32
    %43 = tpu.dynamic_rotate %1 by %c15_i32 dim 1 : vector<4x256xf32>, i32 -> vector<4x256xf32>
    %c2_25 = arith.constant 2 : index
    %c0_26 = arith.constant 0 : index
    %44 = vector.load %arg7[%c2_25, %c0_26] : memref<9x256xf32, #tpu.memory_space<vmem>>, vector<1x256xf32>
    %45 = vector.broadcast %44 : vector<1x256xf32> to vector<4x256xf32>
    %46 = arith.mulf %43, %45 : vector<4x256xf32>
    %c1_i32 = arith.constant 1 : i32
    %47 = tpu.dynamic_rotate %1 by %c1_i32 dim 1 : vector<4x256xf32>, i32 -> vector<4x256xf32>
    %c3 = arith.constant 3 : index
    %c0_27 = arith.constant 0 : index
    %48 = vector.load %arg7[%c3, %c0_27] : memref<9x256xf32, #tpu.memory_space<vmem>>, vector<1x256xf32>
    %49 = vector.broadcast %48 : vector<1x256xf32> to vector<4x256xf32>
    %50 = arith.mulf %47, %49 : vector<4x256xf32>
    %c255_i32 = arith.constant 255 : i32
    %51 = tpu.dynamic_rotate %1 by %c255_i32 dim 1 : vector<4x256xf32>, i32 -> vector<4x256xf32>
    %c5 = arith.constant 5 : index
    %c0_28 = arith.constant 0 : index
    %52 = vector.load %arg7[%c5, %c0_28] : memref<9x256xf32, #tpu.memory_space<vmem>>, vector<1x256xf32>
    %53 = vector.broadcast %52 : vector<1x256xf32> to vector<4x256xf32>
    %54 = arith.mulf %51, %53 : vector<4x256xf32>
    %c241_i32 = arith.constant 241 : i32
    %55 = tpu.dynamic_rotate %1 by %c241_i32 dim 1 : vector<4x256xf32>, i32 -> vector<4x256xf32>
    %c6 = arith.constant 6 : index
    %c0_29 = arith.constant 0 : index
    %56 = vector.load %arg7[%c6, %c0_29] : memref<9x256xf32, #tpu.memory_space<vmem>>, vector<1x256xf32>
    %57 = vector.broadcast %56 : vector<1x256xf32> to vector<4x256xf32>
    %58 = arith.mulf %55, %57 : vector<4x256xf32>
    %c240_i32 = arith.constant 240 : i32
    %59 = tpu.dynamic_rotate %1 by %c240_i32 dim 1 : vector<4x256xf32>, i32 -> vector<4x256xf32>
    %c7 = arith.constant 7 : index
    %c0_30 = arith.constant 0 : index
    %60 = vector.load %arg7[%c7, %c0_30] : memref<9x256xf32, #tpu.memory_space<vmem>>, vector<1x256xf32>
    %61 = vector.broadcast %60 : vector<1x256xf32> to vector<4x256xf32>
    %62 = arith.mulf %59, %61 : vector<4x256xf32>
    %c239_i32 = arith.constant 239 : i32
    %63 = tpu.dynamic_rotate %1 by %c239_i32 dim 1 : vector<4x256xf32>, i32 -> vector<4x256xf32>
    %c8 = arith.constant 8 : index
    %c0_31 = arith.constant 0 : index
    %64 = vector.load %arg7[%c8, %c0_31] : memref<9x256xf32, #tpu.memory_space<vmem>>, vector<1x256xf32>
    %65 = vector.broadcast %64 : vector<1x256xf32> to vector<4x256xf32>
    %66 = arith.mulf %63, %65 : vector<4x256xf32>
    %cst_32 = arith.constant 0.000000e+00 : f32
    %67 = vector.broadcast %cst_32 : f32 to vector<8x256xf32>
    %68 = vector.extract_strided_slice %34 {offsets = [0, 0, 0], sizes = [1, 8, 4], strides = [1, 1, 1]} : vector<16x8x4xf32> to vector<1x8x4xf32>
    %69 = vector.shape_cast %68 : vector<1x8x4xf32> to vector<8x4xf32>
    %cst_33 = arith.constant dense<0.000000e+00> : vector<8x256xf32>
    %70 = tpu.matmul %69, %38, %cst_33 {dimension_numbers = #tpu.dot_dimension_numbers<[1], [0], [0], [1], [0, 0, 1, 1], [], []>} : vector<8x4xf32>, vector<4x256xf32>, vector<8x256xf32> -> vector<8x256xf32>
    %71 = arith.addf %67, %70 : vector<8x256xf32>
    %72 = vector.extract_strided_slice %34 {offsets = [1, 0, 0], sizes = [1, 8, 4], strides = [1, 1, 1]} : vector<16x8x4xf32> to vector<1x8x4xf32>
    %73 = vector.shape_cast %72 : vector<1x8x4xf32> to vector<8x4xf32>
    %cst_34 = arith.constant dense<0.000000e+00> : vector<8x256xf32>
    %74 = tpu.matmul %73, %42, %cst_34 {dimension_numbers = #tpu.dot_dimension_numbers<[1], [0], [0], [1], [0, 0, 1, 1], [], []>} : vector<8x4xf32>, vector<4x256xf32>, vector<8x256xf32> -> vector<8x256xf32>
    %75 = arith.addf %71, %74 : vector<8x256xf32>
    %76 = vector.extract_strided_slice %34 {offsets = [2, 0, 0], sizes = [1, 8, 4], strides = [1, 1, 1]} : vector<16x8x4xf32> to vector<1x8x4xf32>
    %77 = vector.shape_cast %76 : vector<1x8x4xf32> to vector<8x4xf32>
    %cst_35 = arith.constant dense<0.000000e+00> : vector<8x256xf32>
    %78 = tpu.matmul %77, %50, %cst_35 {dimension_numbers = #tpu.dot_dimension_numbers<[1], [0], [0], [1], [0, 0, 1, 1], [], []>} : vector<8x4xf32>, vector<4x256xf32>, vector<8x256xf32> -> vector<8x256xf32>
    %79 = arith.addf %75, %78 : vector<8x256xf32>
    %80 = vector.extract_strided_slice %34 {offsets = [3, 0, 0], sizes = [1, 8, 4], strides = [1, 1, 1]} : vector<16x8x4xf32> to vector<1x8x4xf32>
    %81 = vector.shape_cast %80 : vector<1x8x4xf32> to vector<8x4xf32>
    %cst_36 = arith.constant dense<0.000000e+00> : vector<8x256xf32>
    %82 = tpu.matmul %81, %1, %cst_36 {dimension_numbers = #tpu.dot_dimension_numbers<[1], [0], [0], [1], [0, 0, 1, 1], [], []>} : vector<8x4xf32>, vector<4x256xf32>, vector<8x256xf32> -> vector<8x256xf32>
    %83 = arith.addf %79, %82 : vector<8x256xf32>
    %c0_37 = arith.constant 0 : index
    %c0_38 = arith.constant 0 : index
    %84 = vector.load %arg6[%c0_37, %c0_38] : memref<8x1xf32, #tpu.memory_space<vmem>>, vector<8x1xf32>
    %85 = vector.broadcast %84 : vector<8x1xf32> to vector<8x256xf32>
    %86 = arith.addf %83, %85 : vector<8x256xf32>
    %cst_39 = arith.constant 0.000000e+00 : f32
    %87 = vector.broadcast %cst_39 : f32 to vector<8x256xf32>
    %88 = arith.maximumf %86, %87 : vector<8x256xf32>
    %c0_40 = arith.constant 0 : index
    %c0_41 = arith.constant 0 : index
    %c0_42 = arith.constant 0 : index
    %c0_43 = arith.constant 0 : index
    %89 = vector.load %arg8[%c0_40, %c0_41, %c0_42, %c0_43] : memref<1x4x8x256xf32, #tpu.memory_space<vmem>>, vector<1x1x8x256xf32>
    %90 = vector.shape_cast %89 : vector<1x1x8x256xf32> to vector<8x256xf32>
    %91 = vector.shape_cast %88 : vector<8x256xf32> to vector<1x1x8x256xf32>
    tpu.vector_store %arg8[%c0_40, %c0_41, %c0_42, %c0_43], %91 {strides = array<i32>} : memref<1x4x8x256xf32, #tpu.memory_space<vmem>>, vector<1x1x8x256xf32>,
    %cst_44 = arith.constant 0.000000e+00 : f32
    %92 = vector.broadcast %cst_44 : f32 to vector<8x256xf32>
    %93 = vector.extract_strided_slice %34 {offsets = [4, 0, 0], sizes = [1, 8, 4], strides = [1, 1, 1]} : vector<16x8x4xf32> to vector<1x8x4xf32>
    %94 = vector.shape_cast %93 : vector<1x8x4xf32> to vector<8x4xf32>
    %cst_45 = arith.constant dense<0.000000e+00> : vector<8x256xf32>
    %95 = tpu.matmul %94, %42, %cst_45 {dimension_numbers = #tpu.dot_dimension_numbers<[1], [0], [0], [1], [0, 0, 1, 1], [], []>} : vector<8x4xf32>, vector<4x256xf32>, vector<8x256xf32> -> vector<8x256xf32>
    %96 = arith.addf %92, %95 : vector<8x256xf32>
    %97 = vector.extract_strided_slice %34 {offsets = [5, 0, 0], sizes = [1, 8, 4], strides = [1, 1, 1]} : vector<16x8x4xf32> to vector<1x8x4xf32>
    %98 = vector.shape_cast %97 : vector<1x8x4xf32> to vector<8x4xf32>
    %cst_46 = arith.constant dense<0.000000e+00> : vector<8x256xf32>
    %99 = tpu.matmul %98, %46, %cst_46 {dimension_numbers = #tpu.dot_dimension_numbers<[1], [0], [0], [1], [0, 0, 1, 1], [], []>} : vector<8x4xf32>, vector<4x256xf32>, vector<8x256xf32> -> vector<8x256xf32>
    %100 = arith.addf %96, %99 : vector<8x256xf32>
    %101 = vector.extract_strided_slice %34 {offsets = [6, 0, 0], sizes = [1, 8, 4], strides = [1, 1, 1]} : vector<16x8x4xf32> to vector<1x8x4xf32>
    %102 = vector.shape_cast %101 : vector<1x8x4xf32> to vector<8x4xf32>
    %cst_47 = arith.constant dense<0.000000e+00> : vector<8x256xf32>
    %103 = tpu.matmul %102, %1, %cst_47 {dimension_numbers = #tpu.dot_dimension_numbers<[1], [0], [0], [1], [0, 0, 1, 1], [], []>} : vector<8x4xf32>, vector<4x256xf32>, vector<8x256xf32> -> vector<8x256xf32>
    %104 = arith.addf %100, %103 : vector<8x256xf32>
    %105 = vector.extract_strided_slice %34 {offsets = [7, 0, 0], sizes = [1, 8, 4], strides = [1, 1, 1]} : vector<16x8x4xf32> to vector<1x8x4xf32>
    %106 = vector.shape_cast %105 : vector<1x8x4xf32> to vector<8x4xf32>
    %cst_48 = arith.constant dense<0.000000e+00> : vector<8x256xf32>
    %107 = tpu.matmul %106, %54, %cst_48 {dimension_numbers = #tpu.dot_dimension_numbers<[1], [0], [0], [1], [0, 0, 1, 1], [], []>} : vector<8x4xf32>, vector<4x256xf32>, vector<8x256xf32> -> vector<8x256xf32>
    %108 = arith.addf %104, %107 : vector<8x256xf32>
    %c0_49 = arith.constant 0 : index
    %c0_50 = arith.constant 0 : index
    %109 = vector.load %arg6[%c0_49, %c0_50] : memref<8x1xf32, #tpu.memory_space<vmem>>, vector<8x1xf32>
    %110 = vector.broadcast %109 : vector<8x1xf32> to vector<8x256xf32>
    %111 = arith.addf %108, %110 : vector<8x256xf32>
    %cst_51 = arith.constant 0.000000e+00 : f32
    %112 = vector.broadcast %cst_51 : f32 to vector<8x256xf32>
    %113 = arith.maximumf %111, %112 : vector<8x256xf32>
    %c0_52 = arith.constant 0 : index
    %c1_53 = arith.constant 1 : index
    %c0_54 = arith.constant 0 : index
    %c0_55 = arith.constant 0 : index
    %114 = vector.load %arg8[%c0_52, %c1_53, %c0_54, %c0_55] : memref<1x4x8x256xf32, #tpu.memory_space<vmem>>, vector<1x1x8x256xf32>
    %115 = vector.shape_cast %114 : vector<1x1x8x256xf32> to vector<8x256xf32>
    %116 = vector.shape_cast %113 : vector<8x256xf32> to vector<1x1x8x256xf32>
    tpu.vector_store %arg8[%c0_52, %c1_53, %c0_54, %c0_55], %116 {strides = array<i32>} : memref<1x4x8x256xf32, #tpu.memory_space<vmem>>, vector<1x1x8x256xf32>,
    %cst_56 = arith.constant 0.000000e+00 : f32
    %117 = vector.broadcast %cst_56 : f32 to vector<8x256xf32>
    %118 = vector.extract_strided_slice %34 {offsets = [8, 0, 0], sizes = [1, 8, 4], strides = [1, 1, 1]} : vector<16x8x4xf32> to vector<1x8x4xf32>
    %119 = vector.shape_cast %118 : vector<1x8x4xf32> to vector<8x4xf32>
    %cst_57 = arith.constant dense<0.000000e+00> : vector<8x256xf32>
    %120 = tpu.matmul %119, %50, %cst_57 {dimension_numbers = #tpu.dot_dimension_numbers<[1], [0], [0], [1], [0, 0, 1, 1], [], []>} : vector<8x4xf32>, vector<4x256xf32>, vector<8x256xf32> -> vector<8x256xf32>
    %121 = arith.addf %117, %120 : vector<8x256xf32>
    %122 = vector.extract_strided_slice %34 {offsets = [9, 0, 0], sizes = [1, 8, 4], strides = [1, 1, 1]} : vector<16x8x4xf32> to vector<1x8x4xf32>
    %123 = vector.shape_cast %122 : vector<1x8x4xf32> to vector<8x4xf32>
    %cst_58 = arith.constant dense<0.000000e+00> : vector<8x256xf32>
    %124 = tpu.matmul %123, %1, %cst_58 {dimension_numbers = #tpu.dot_dimension_numbers<[1], [0], [0], [1], [0, 0, 1, 1], [], []>} : vector<8x4xf32>, vector<4x256xf32>, vector<8x256xf32> -> vector<8x256xf32>
    %125 = arith.addf %121, %124 : vector<8x256xf32>
    %126 = vector.extract_strided_slice %34 {offsets = [10, 0, 0], sizes = [1, 8, 4], strides = [1, 1, 1]} : vector<16x8x4xf32> to vector<1x8x4xf32>
    %127 = vector.shape_cast %126 : vector<1x8x4xf32> to vector<8x4xf32>
    %cst_59 = arith.constant dense<0.000000e+00> : vector<8x256xf32>
    %128 = tpu.matmul %127, %58, %cst_59 {dimension_numbers = #tpu.dot_dimension_numbers<[1], [0], [0], [1], [0, 0, 1, 1], [], []>} : vector<8x4xf32>, vector<4x256xf32>, vector<8x256xf32> -> vector<8x256xf32>
    %129 = arith.addf %125, %128 : vector<8x256xf32>
    %130 = vector.extract_strided_slice %34 {offsets = [11, 0, 0], sizes = [1, 8, 4], strides = [1, 1, 1]} : vector<16x8x4xf32> to vector<1x8x4xf32>
    %131 = vector.shape_cast %130 : vector<1x8x4xf32> to vector<8x4xf32>
    %cst_60 = arith.constant dense<0.000000e+00> : vector<8x256xf32>
    %132 = tpu.matmul %131, %62, %cst_60 {dimension_numbers = #tpu.dot_dimension_numbers<[1], [0], [0], [1], [0, 0, 1, 1], [], []>} : vector<8x4xf32>, vector<4x256xf32>, vector<8x256xf32> -> vector<8x256xf32>
    %133 = arith.addf %129, %132 : vector<8x256xf32>
    %c0_61 = arith.constant 0 : index
    %c0_62 = arith.constant 0 : index
    %134 = vector.load %arg6[%c0_61, %c0_62] : memref<8x1xf32, #tpu.memory_space<vmem>>, vector<8x1xf32>
    %135 = vector.broadcast %134 : vector<8x1xf32> to vector<8x256xf32>
    %136 = arith.addf %133, %135 : vector<8x256xf32>
    %cst_63 = arith.constant 0.000000e+00 : f32
    %137 = vector.broadcast %cst_63 : f32 to vector<8x256xf32>
    %138 = arith.maximumf %136, %137 : vector<8x256xf32>
    %c0_64 = arith.constant 0 : index
    %c2_65 = arith.constant 2 : index
    %c0_66 = arith.constant 0 : index
    %c0_67 = arith.constant 0 : index
    %139 = vector.load %arg8[%c0_64, %c2_65, %c0_66, %c0_67] : memref<1x4x8x256xf32, #tpu.memory_space<vmem>>, vector<1x1x8x256xf32>
    %140 = vector.shape_cast %139 : vector<1x1x8x256xf32> to vector<8x256xf32>
    %141 = vector.shape_cast %138 : vector<8x256xf32> to vector<1x1x8x256xf32>
    tpu.vector_store %arg8[%c0_64, %c2_65, %c0_66, %c0_67], %141 {strides = array<i32>} : memref<1x4x8x256xf32, #tpu.memory_space<vmem>>, vector<1x1x8x256xf32>,
    %cst_68 = arith.constant 0.000000e+00 : f32
    %142 = vector.broadcast %cst_68 : f32 to vector<8x256xf32>
    %143 = vector.extract_strided_slice %34 {offsets = [12, 0, 0], sizes = [1, 8, 4], strides = [1, 1, 1]} : vector<16x8x4xf32> to vector<1x8x4xf32>
    %144 = vector.shape_cast %143 : vector<1x8x4xf32> to vector<8x4xf32>
    %cst_69 = arith.constant dense<0.000000e+00> : vector<8x256xf32>
    %145 = tpu.matmul %144, %1, %cst_69 {dimension_numbers = #tpu.dot_dimension_numbers<[1], [0], [0], [1], [0, 0, 1, 1], [], []>} : vector<8x4xf32>, vector<4x256xf32>, vector<8x256xf32> -> vector<8x256xf32>
    %146 = arith.addf %142, %145 : vector<8x256xf32>
    %147 = vector.extract_strided_slice %34 {offsets = [13, 0, 0], sizes = [1, 8, 4], strides = [1, 1, 1]} : vector<16x8x4xf32> to vector<1x8x4xf32>
    %148 = vector.shape_cast %147 : vector<1x8x4xf32> to vector<8x4xf32>
    %cst_70 = arith.constant dense<0.000000e+00> : vector<8x256xf32>
    %149 = tpu.matmul %148, %54, %cst_70 {dimension_numbers = #tpu.dot_dimension_numbers<[1], [0], [0], [1], [0, 0, 1, 1], [], []>} : vector<8x4xf32>, vector<4x256xf32>, vector<8x256xf32> -> vector<8x256xf32>
    %150 = arith.addf %146, %149 : vector<8x256xf32>
    %151 = vector.extract_strided_slice %34 {offsets = [14, 0, 0], sizes = [1, 8, 4], strides = [1, 1, 1]} : vector<16x8x4xf32> to vector<1x8x4xf32>
    %152 = vector.shape_cast %151 : vector<1x8x4xf32> to vector<8x4xf32>
    %cst_71 = arith.constant dense<0.000000e+00> : vector<8x256xf32>
    %153 = tpu.matmul %152, %62, %cst_71 {dimension_numbers = #tpu.dot_dimension_numbers<[1], [0], [0], [1], [0, 0, 1, 1], [], []>} : vector<8x4xf32>, vector<4x256xf32>, vector<8x256xf32> -> vector<8x256xf32>
    %154 = arith.addf %150, %153 : vector<8x256xf32>
    %155 = vector.extract_strided_slice %34 {offsets = [15, 0, 0], sizes = [1, 8, 4], strides = [1, 1, 1]} : vector<16x8x4xf32> to vector<1x8x4xf32>
    %156 = vector.shape_cast %155 : vector<1x8x4xf32> to vector<8x4xf32>
    %cst_72 = arith.constant dense<0.000000e+00> : vector<8x256xf32>
    %157 = tpu.matmul %156, %66, %cst_72 {dimension_numbers = #tpu.dot_dimension_numbers<[1], [0], [0], [1], [0, 0, 1, 1], [], []>} : vector<8x4xf32>, vector<4x256xf32>, vector<8x256xf32> -> vector<8x256xf32>
    %158 = arith.addf %154, %157 : vector<8x256xf32>
    %c0_73 = arith.constant 0 : index
    %c0_74 = arith.constant 0 : index
    %159 = vector.load %arg6[%c0_73, %c0_74] : memref<8x1xf32, #tpu.memory_space<vmem>>, vector<8x1xf32>
    %160 = vector.broadcast %159 : vector<8x1xf32> to vector<8x256xf32>
    %161 = arith.addf %158, %160 : vector<8x256xf32>
    %cst_75 = arith.constant 0.000000e+00 : f32
    %162 = vector.broadcast %cst_75 : f32 to vector<8x256xf32>
    %163 = arith.maximumf %161, %162 : vector<8x256xf32>
    %c0_76 = arith.constant 0 : index
    %c3_77 = arith.constant 3 : index
    %c0_78 = arith.constant 0 : index
    %c0_79 = arith.constant 0 : index
    %164 = vector.load %arg8[%c0_76, %c3_77, %c0_78, %c0_79] : memref<1x4x8x256xf32, #tpu.memory_space<vmem>>, vector<1x1x8x256xf32>
    %165 = vector.shape_cast %164 : vector<1x1x8x256xf32> to vector<8x256xf32>
    %166 = vector.shape_cast %163 : vector<8x256xf32> to vector<1x1x8x256xf32>
    tpu.vector_store %arg8[%c0_76, %c3_77, %c0_78, %c0_79], %166 {strides = array<i32>} : memref<1x4x8x256xf32, #tpu.memory_space<vmem>>, vector<1x1x8x256xf32>,
    return
  }
  func.func @transform_0(%arg0: i32) -> (i32, i32, i32) {
    %c0_i32 = arith.constant 0 : i32
    %c0_i32_0 = arith.constant 0 : i32
    %c0_i32_1 = arith.constant 0 : i32
    return %arg0, %c0_i32, %c0_i32_0 : i32, i32, i32
  }
  func.func @transform_1(%arg0: i32) -> (i32, i32, i32) {
    %c0_i32 = arith.constant 0 : i32
    %c0_i32_0 = arith.constant 0 : i32
    %c0_i32_1 = arith.constant 0 : i32
    return %arg0, %c0_i32, %c0_i32_0 : i32, i32, i32
  }
  func.func @transform_2(%arg0: i32) -> (i32, i32) {
    %c0_i32 = arith.constant 0 : i32
    %c0_i32_0 = arith.constant 0 : i32
    %c0_i32_1 = arith.constant 0 : i32
    return %c0_i32, %c0_i32_0 : i32, i32
  }
  func.func @transform_3(%arg0: i32) -> (i32, i32) {
    %c0_i32 = arith.constant 0 : i32
    %c0_i32_0 = arith.constant 0 : i32
    %c0_i32_1 = arith.constant 0 : i32
    return %c0_i32, %c0_i32_0 : i32, i32
  }
  func.func @transform_4(%arg0: i32) -> (i32, i32, i32, i32) {
    %c0_i32 = arith.constant 0 : i32
    %c0_i32_0 = arith.constant 0 : i32
    %c0_i32_1 = arith.constant 0 : i32
    %c0_i32_2 = arith.constant 0 : i32
    %c0_i32_3 = arith.constant 0 : i32
    return %c0_i32, %c0_i32_0, %c0_i32_1, %c0_i32_2 : i32, i32, i32, i32
  }
  func.func @transform_5(%arg0: i32) -> (i32, i32) {
    %c0_i32 = arith.constant 0 : i32
    %c0_i32_0 = arith.constant 0 : i32
    %c0_i32_1 = arith.constant 0 : i32
    return %c0_i32, %c0_i32_0 : i32, i32
  }
  func.func @transform_6(%arg0: i32) -> (i32, i32) {
    %c0_i32 = arith.constant 0 : i32
    %c0_i32_0 = arith.constant 0 : i32
    %c0_i32_1 = arith.constant 0 : i32
    return %c0_i32, %c0_i32_0 : i32, i32
  }
  func.func @transform_7(%arg0: i32) -> (i32, i32, i32, i32) {
    %c0_i32 = arith.constant 0 : i32
    %c0_i32_0 = arith.constant 0 : i32
    %c0_i32_1 = arith.constant 0 : i32
    %c0_i32_2 = arith.constant 0 : i32
    return %arg0, %c0_i32, %c0_i32_0, %c0_i32_1 : i32, i32, i32, i32
  }
}

</mosaic_0001>

<llo_original>
// kernel: tpu_custom_call.1
$region0: #{tpu_custom_call.1}
  #allocation0 [shape = 'u32[]', space=smem, size = 0x4, offset = 0x4, fixed_abs, tag = 'smem constant byte address 0x4 - core index']
  #allocation1 [shape = 'u32[144,128]{1,0:T(1,128)}', space=vmem, size = 0x12000, scoped, tag = 'internal scratch']
  %s0 = inlined_call_operand.vmem [shape: f32[2,4,256], index: 0, kind: input, shape index: {}]
  %s1 = inlined_call_operand.vmem [shape: f32[2,4,1], index: 1, kind: input, shape index: {}]
  %s2 = inlined_call_operand.vmem [shape: f32[3,4], index: 2, kind: input, shape index: {}]
  %s3 = inlined_call_operand.vmem [shape: f32[3,1], index: 3, kind: input, shape index: {}]
  %s4 = inlined_call_operand.vmem [shape: f32[3,16,8,4], index: 4, kind: input, shape index: {}]
  %s5 = inlined_call_operand.vmem [shape: f32[8,1], index: 5, kind: input, shape index: {}]
  %s6 = inlined_call_operand.vmem [shape: f32[9,256], index: 6, kind: input, shape index: {}]
  %s7 = inlined_call_operand.hbm [shape: f32[2,4,8,256], index: 7, kind: output, shape index: {}]
  %s8 = sld [smem:[#allocation0]]
  $region61: #{tpu_custom_call.1} parent=0
    _
  %s10 = ssub.s32 1, %s8
  %s11 = scalar_select 0, %s10, %s8
  $region1: #{tpu_custom_call.1} parent=0
    #allocation2 [shape = 'u8[65536]{0}', space=vmem, size = 0x10000, scoped, tag = 'output window, operand 0']
    #allocation3 [shape = 's32[2]{0}', space=sflag, size = 0x8, scoped, tag = 'scoped memory for tpu_custom_call.1']
    %12 = vsyncpa [#allocation3], 0
    %s13 = scalar_lea.sflag [#allocation3], 1
    %14 = vsyncpa %s13, 0
    loop: start=0, step=1, limit=4
    $region2: #{tpu_custom_call.1} parent=1 // loop_pre_header
      _
    $region3: #{tpu_custom_call.1} parent=1 // loop_header
      %s16 = sphi 0, %s20
      %p17 = scmp.ge.s32.totalorder %s16, 4
      %s26 = sphi 0, %s28
      %s29 = sphi 0, %s26
      %s30 = sphi 0, %s29
      %s46 = sphi 0, %s30
      %s52 = sphi 0, %s54
      %s55 = sphi 0, %s52
      %s56 = sphi 0, %s55
      %s72 = sphi 0, %s56
      %s76 = sphi 0, %s76
      %s78 = sphi 0, %s76
      %s79 = sphi 0, %s78
      %s93 = sphi 0, %s79
      %s97 = sphi 0, %s97
      %s99 = sphi 0, %s97
      %s100 = sphi 0, %s99
      %s114 = sphi 0, %s100
      %s118 = sphi 0, %s118
      %s120 = sphi 0, %s118
      %s121 = sphi 0, %s120
      %s135 = sphi 0, %s121
      %s139 = sphi 0, %s139
      %s141 = sphi 0, %s139
      %s142 = sphi 0, %s141
      %s156 = sphi 0, %s142
      %s160 = sphi 0, %s160
      %s162 = sphi 0, %s160
      %s163 = sphi 0, %s162
      %s177 = sphi 0, %s163
      %s183 = sphi 0, %s185
      %s186 = sphi 0, %s183
      %s187 = sphi 0, %s186
      %s203 = sphi 0, %s187
    $region4: #{tpu_custom_call.1} parent=1 // loop_header_branch
      %19 = sbr.rel (%p17) target = $region8
    $region5: #{tpu_custom_call.1} parent=1 // loop_body
      %s21 = ssub.s32 %s16, 1
      %s22 = ssub.s32 %s16, 2
      %s23 = sadd.s32 %s16, 1
      %s24 = ssub.s32 %s16, %s23
      %p25 = scmp.eq.s32.totalorder %s24, 0
      %s27 = sadd.s32 %s26, 1
      %s28 = scalar_select %p25, %s26, %s27
      %p31 = pneg %p25
      %p32 = scmp.eq.s32.totalorder %s16, 1
      %p33 = por %p31, %p32
      %p34 = scmp.ne.s32.totalorder %s26, %s29
      %p35 = scmp.eq.s32.totalorder %s16, 0
      %p36 = por %p34, %p35
      %p37 = scmp.ne.s32.totalorder %s26, %s29
      %p38 = scmp.eq.s32.totalorder %s21, 1
      %p39 = por %p37, %p38
      %p40 = scmp.ne.s32.totalorder %s29, %s30
      %p41 = scmp.eq.s32.totalorder %s21, 0
      %p42 = por %p40, %p41
      %p43 = scmp.ne.s32.totalorder %s29, %s30
      %p44 = scmp.eq.s32.totalorder %s22, 1
      %p45 = por %p43, %p44
      %p47 = scmp.ne.s32.totalorder %s30, %s46
      %p48 = scmp.eq.s32.totalorder %s22, 0
      %p49 = por %p47, %p48
      %s50 = ssub.s32 %s16, %s23
      %p51 = scmp.eq.s32.totalorder %s50, 0
      %s53 = sadd.s32 %s52, 1
      %s54 = scalar_select %p51, %s52, %s53
      %p57 = pneg %p51
      %p58 = scmp.eq.s32.totalorder %s16, 1
      %p59 = por %p57, %p58
      %p60 = scmp.ne.s32.totalorder %s52, %s55
      %p61 = scmp.eq.s32.totalorder %s16, 0
      %p62 = por %p60, %p61
      %p63 = scmp.ne.s32.totalorder %s52, %s55
      %p64 = scmp.eq.s32.totalorder %s21, 1
      %p65 = por %p63, %p64
      %p66 = scmp.ne.s32.totalorder %s55, %s56
      %p67 = scmp.eq.s32.totalorder %s21, 0
      %p68 = por %p66, %p67
      %p69 = scmp.ne.s32.totalorder %s55, %s56
      %p70 = scmp.eq.s32.totalorder %s22, 1
      %p71 = por %p69, %p70
      %p73 = scmp.ne.s32.totalorder %s56, %s72
      %p74 = scmp.eq.s32.totalorder %s22, 0
      %p75 = por %p73, %p74
      %s77 = sadd.s32 %s76, 1
      %p80 = scmp.eq.s32.totalorder %s16, 1
      %p81 = scmp.ne.s32.totalorder %s76, %s78
      %p82 = scmp.eq.s32.totalorder %s16, 0
      %p83 = por %p81, %p82
      %p84 = scmp.ne.s32.totalorder %s76, %s78
      %p85 = scmp.eq.s32.totalorder %s21, 1
      %p86 = por %p84, %p85
      %p87 = scmp.ne.s32.totalorder %s78, %s79
      %p88 = scmp.eq.s32.totalorder %s21, 0
      %p89 = por %p87, %p88
      %p90 = scmp.ne.s32.totalorder %s78, %s79
      %p91 = scmp.eq.s32.totalorder %s22, 1
      %p92 = por %p90, %p91
      %p94 = scmp.ne.s32.totalorder %s79, %s93
      %p95 = scmp.eq.s32.totalorder %s22, 0
      %p96 = por %p94, %p95
      %s98 = sadd.s32 %s97, 1
      %p101 = scmp.eq.s32.totalorder %s16, 1
      %p102 = scmp.ne.s32.totalorder %s97, %s99
      %p103 = scmp.eq.s32.totalorder %s16, 0
      %p104 = por %p102, %p103
      %p105 = scmp.ne.s32.totalorder %s97, %s99
      %p106 = scmp.eq.s32.totalorder %s21, 1
      %p107 = por %p105, %p106
      %p108 = scmp.ne.s32.totalorder %s99, %s100
      %p109 = scmp.eq.s32.totalorder %s21, 0
      %p110 = por %p108, %p109
      %p111 = scmp.ne.s32.totalorder %s99, %s100
      %p112 = scmp.eq.s32.totalorder %s22, 1
      %p113 = por %p111, %p112
      %p115 = scmp.ne.s32.totalorder %s100, %s114
      %p116 = scmp.eq.s32.totalorder %s22, 0
      %p117 = por %p115, %p116
      %s119 = sadd.s32 %s118, 1
      %p122 = scmp.eq.s32.totalorder %s16, 1
      %p123 = scmp.ne.s32.totalorder %s118, %s120
      %p124 = scmp.eq.s32.totalorder %s16, 0
      %p125 = por %p123, %p124
      %p126 = scmp.ne.s32.totalorder %s118, %s120
      %p127 = scmp.eq.s32.totalorder %s21, 1
      %p128 = por %p126, %p127
      %p129 = scmp.ne.s32.totalorder %s120, %s121
      %p130 = scmp.eq.s32.totalorder %s21, 0
      %p131 = por %p129, %p130
      %p132 = scmp.ne.s32.totalorder %s120, %s121
      %p133 = scmp.eq.s32.totalorder %s22, 1
      %p134 = por %p132, %p133
      %p136 = scmp.ne.s32.totalorder %s121, %s135
      %p137 = scmp.eq.s32.totalorder %s22, 0
      %p138 = por %p136, %p137
      %s140 = sadd.s32 %s139, 1
      %p143 = scmp.eq.s32.totalorder %s16, 1
      %p144 = scmp.ne.s32.totalorder %s139, %s141
      %p145 = scmp.eq.s32.totalorder %s16, 0
      %p146 = por %p144, %p145
      %p147 = scmp.ne.s32.totalorder %s139, %s141
      %p148 = scmp.eq.s32.totalorder %s21, 1
      %p149 = por %p147, %p148
      %p150 = scmp.ne.s32.totalorder %s141, %s142
      %p151 = scmp.eq.s32.totalorder %s21, 0
      %p152 = por %p150, %p151
      %p153 = scmp.ne.s32.totalorder %s141, %s142
      %p154 = scmp.eq.s32.totalorder %s22, 1
      %p155 = por %p153, %p154
      %p157 = scmp.ne.s32.totalorder %s142, %s156
      %p158 = scmp.eq.s32.totalorder %s22, 0
      %p159 = por %p157, %p158
      %s161 = sadd.s32 %s160, 1
      %p164 = scmp.eq.s32.totalorder %s16, 1
      %p165 = scmp.ne.s32.totalorder %s160, %s162
      %p166 = scmp.eq.s32.totalorder %s16, 0
      %p167 = por %p165, %p166
      %p168 = scmp.ne.s32.totalorder %s160, %s162
      %p169 = scmp.eq.s32.totalorder %s21, 1
      %p170 = por %p168, %p169
      %p171 = scmp.ne.s32.totalorder %s162, %s163
      %p172 = scmp.eq.s32.totalorder %s21, 0
      %p173 = por %p171, %p172
      %p174 = scmp.ne.s32.totalorder %s162, %s163
      %p175 = scmp.eq.s32.totalorder %s22, 1
      %p176 = por %p174, %p175
      %p178 = scmp.ne.s32.totalorder %s163, %s177
      %p179 = scmp.eq.s32.totalorder %s22, 0
      %p180 = por %p178, %p179
      %s181 = ssub.s32 %s16, %s23
      %p182 = scmp.eq.s32.totalorder %s181, 0
      %s184 = sadd.s32 %s183, 1
      %s185 = scalar_select %p182, %s183, %s184
      %p188 = pneg %p182
      %p189 = scmp.eq.s32.totalorder %s16, 1
      %p190 = por %p188, %p189
      %p191 = scmp.ne.s32.totalorder %s183, %s186
      %p192 = scmp.eq.s32.totalorder %s16, 0
      %p193 = por %p191, %p192
      %p194 = scmp.ne.s32.totalorder %s183, %s186
      %p195 = scmp.eq.s32.totalorder %s21, 1
      %p196 = por %p194, %p195
      %p197 = scmp.ne.s32.totalorder %s186, %s187
      %p198 = scmp.eq.s32.totalorder %s21, 0
      %p199 = por %p197, %p198
      %p200 = scmp.ne.s32.totalorder %s186, %s187
      %p201 = scmp.eq.s32.totalorder %s22, 1
      %p202 = por %p200, %p201
      %p204 = scmp.ne.s32.totalorder %s187, %s203
      %p205 = scmp.eq.s32.totalorder %s22, 0
      %p206 = por %p204, %p205
      %p207 = scmp.le.s32.totalorder 1, %s16
      %p208 = scmp.lt.s32.totalorder %s16, 3
      %p209 = pnand %p207, %p208
      %p210 = pneg %p209
      // Predicated region
      $region9: #{tpu_custom_call.1} parent=5 // pred_check
        _
      $region10: #{tpu_custom_call.1} parent=5 // pred_check_branch
        %212 = sbr.rel (%p209) target = $region12
      $region11: #{tpu_custom_call.1} parent=5 // pred_region
        %s213 = ssub.s32 %s16, 1
        // Predicated region
        $region13: #{tpu_custom_call.1} parent=11 // pred_check
          %p214 = pneg %p89
        $region14: #{tpu_custom_call.1} parent=11 // pred_check_branch
          %216 = sbr.rel (%p214) target = $region16
        $region15: #{tpu_custom_call.1} parent=11 // pred_region
          _
        $region16: #{tpu_custom_call.1} parent=11 // pred_fallthru
          _
        // Predicated region
        $region17: #{tpu_custom_call.1} parent=11 // pred_check
          %p217 = pneg %p110
        $region18: #{tpu_custom_call.1} parent=11 // pred_check_branch
          %219 = sbr.rel (%p217) target = $region20
        $region19: #{tpu_custom_call.1} parent=11 // pred_region
          _
        $region20: #{tpu_custom_call.1} parent=11 // pred_fallthru
          _
        // Predicated region
        $region21: #{tpu_custom_call.1} parent=11 // pred_check
          %p220 = pneg %p131
        $region22: #{tpu_custom_call.1} parent=11 // pred_check_branch
          %222 = sbr.rel (%p220) target = $region24
        $region23: #{tpu_custom_call.1} parent=11 // pred_region
          _
        $region24: #{tpu_custom_call.1} parent=11 // pred_fallthru
          _
        // Predicated region
        $region25: #{tpu_custom_call.1} parent=11 // pred_check
          %p223 = pneg %p152
        $region26: #{tpu_custom_call.1} parent=11 // pred_check_branch
          %225 = sbr.rel (%p223) target = $region28
        $region27: #{tpu_custom_call.1} parent=11 // pred_region
          _
        $region28: #{tpu_custom_call.1} parent=11 // pred_fallthru
          _
        // Predicated region
        $region29: #{tpu_custom_call.1} parent=11 // pred_check
          %p226 = pneg %p173
        $region30: #{tpu_custom_call.1} parent=11 // pred_check_branch
          %228 = sbr.rel (%p226) target = $region32
        $region31: #{tpu_custom_call.1} parent=11 // pred_region
          _
        $region32: #{tpu_custom_call.1} parent=11 // pred_fallthru
          _
      $region12: #{tpu_custom_call.1} parent=5 // pred_fallthru
        _
      %p229 = scmp.lt.s32.totalorder %s16, 2
      // Predicated region
      $region33: #{tpu_custom_call.1} parent=5 // pred_check
        %p230 = pneg %p229
      $region34: #{tpu_custom_call.1} parent=5 // pred_check_branch
        %232 = sbr.rel (%p230) target = $region36
      $region35: #{tpu_custom_call.1} parent=5 // pred_region
        // Predicated region
        $region37: #{tpu_custom_call.1} parent=35 // pred_check
          %p233 = pneg %p36
        $region38: #{tpu_custom_call.1} parent=35 // pred_check_branch
          %235 = sbr.rel (%p233) target = $region40
        $region39: #{tpu_custom_call.1} parent=35 // pred_region
          %p236 = scmp.lt.s32.totalorder %s16, 1
          %s237 = scalar_select %p236, %s16, 1
          %s238 = smul.addr %s237, 2
          %s239 = smul.addr %s238, 4
          %s240 = scalar_lea.vmem %s0, %s239
        $region40: #{tpu_custom_call.1} parent=35 // pred_fallthru
          _
        // Predicated region
        $region41: #{tpu_custom_call.1} parent=35 // pred_check
          %p241 = pneg %p62
        $region42: #{tpu_custom_call.1} parent=35 // pred_check_branch
          %243 = sbr.rel (%p241) target = $region44
        $region43: #{tpu_custom_call.1} parent=35 // pred_region
          %p244 = scmp.lt.s32.totalorder %s16, 1
          %s245 = scalar_select %p244, %s16, 1
          %s246 = smul.addr %s245, 4
          %s247 = scalar_lea.vmem %s1, %s246
        $region44: #{tpu_custom_call.1} parent=35 // pred_fallthru
          _
      $region36: #{tpu_custom_call.1} parent=5 // pred_fallthru
        _
      %p248 = scmp.le.s32.totalorder 1, %s16
      %p249 = scmp.lt.s32.totalorder %s16, 3
      %p250 = pnand %p248, %p249
      %p251 = pneg %p250
      // Predicated region
      $region45: #{tpu_custom_call.1} parent=5 // pred_check
        _
      $region46: #{tpu_custom_call.1} parent=5 // pred_check_branch
        %253 = sbr.rel (%p250) target = $region48
      $region47: #{tpu_custom_call.1} parent=5 // pred_region
        %s254 = ssub.s32 %s16, 1
        %p255 = scmp.lt.s32.totalorder %s21, 1
        %s256 = scalar_select %p255, %s21, 1
        %s257 = smul.addr %s256, 2
        %s258 = smul.addr %s257, 4
        %s259 = scalar_lea.vmem %s0, %s258
        %p260 = pneg %p42
        %p261 = pneg %p39
        %p262 = scmp.lt.s32.totalorder %s21, 1
        %s263 = scalar_select %p262, %s21, 1
        %s264 = smul.addr %s263, 4
        %s265 = scalar_lea.vmem %s1, %s264
        %p266 = pneg %p68
        %p267 = pneg %p65
        %p268 = pneg %p89
        %p269 = pneg %p86
        %p270 = pneg %p110
        %p271 = pneg %p107
        %p272 = pneg %p131
        %p273 = pneg %p128
        %p274 = pneg %p152
        %p275 = pneg %p149
        %p276 = pneg %p173
        %p277 = pneg %p170
        %p278 = pneg %p199
        %p279 = pneg %p196
        %s280 = sand.u32 %s186, 1
        %s281 = scalar_lea.sflag [#allocation3], %s280
        %s282 = sand.u32 %s186, 1
        %s283 = smul.addr %s282, 64
        %s284 = scalar_lea.vmem [#allocation2], %s283
        %p285 = scmp.lt.s32.totalorder %s21, 1
        %s286 = scalar_select %p285, %s21, 1
        %s287 = smul.addr %s286, 2
        %s288 = smul.addr %s287, 4
        %s289 = scalar_lea.vmem %s0, %s288
        %p290 = scmp.lt.s32.totalorder %s21, 1
        %s291 = scalar_select %p290, %s21, 1
        %s292 = smul.addr %s291, 4
        %s293 = scalar_lea.vmem %s1, %s292
        %v294 = vld [vmem:[%s289] sm:$0xff]
        %v295 = vld [vmem:[%s2] sm:$0x7]
        %v296 = vld [vmem:[%s293] sm:$0xf]
        %v297 = vld [vmem:[%s3] sm:$0x7]
        %vm298 = vcmask 31744
        %v300 = vsel %vm298, %v295, 0
        %vm302 = vcmask 1043456
        %v304 = vsel %vm302, %v296, 0
        %306 = vmatprep.subr.mxu0 0.0
        %307 = vmatpush1.msra.mxu0 %v304
        %308 = vmatprep.subr.mxu0 0.0
        %309 = vmatpush1.msra.mxu0 0.0
        %310 = vmatprep.subr.mxu0 0.0
        %311 = vmatpush1.msra.mxu0 0.0
        %312 = vmatprep.subr.mxu0 0.0
        %313 = vmatpush1.msra.mxu0 0.0
        %314 = vmatprep.subr.mxu0 0.0
        %315 = vmatpush1.msra.mxu0 0.0
        %316 = vmatprep.subr.mxu0 0.0
        %317 = vmatpush1.msra.mxu0 0.0
        %318 = vmatprep.subr.mxu0 0.0
        %319 = vmatpush1.msra.mxu0 0.0
        %320 = vmatprep.subr.mxu0 0.0
        %321 = vmatpush1.msra.mxu0 0.0
        %322 = vmatprep.subr.mxu0 0.0
        %323 = vmatpush1.msra.mxu0 0.0
        %324 = vmatprep.subr.mxu0 0.0
        %325 = vmatpush1.msra.mxu0 0.0
        %326 = vmatprep.subr.mxu0 0.0
        %327 = vmatpush1.msra.mxu0 0.0
        %328 = vmatprep.subr.mxu0 0.0
        %329 = vmatpush1.msra.mxu0 0.0
        %330 = vmatprep.subr.mxu0 0.0
        %331 = vmatpush1.msra.mxu0 0.0
        %332 = vmatprep.subr.mxu0 0.0
        %333 = vmatpush1.msra.mxu0 0.0
        %334 = vmatprep.subr.mxu0 0.0
        %335 = vmatpush1.msra.mxu0 0.0
        %336 = vmatprep.subr.mxu0 0.0
        %337 = vmatpush1.msra.mxu0 0.0
        %338 = vmatprep.subr.mxu0 0.0
        %339 = vmatpush1.msra.mxu0 0.0
        %340 = vmatprep.subr.mxu0 0.0
        %341 = vmatpush1.msra.mxu0 0.0
        %342 = vmatprep.subr.mxu0 0.0
        %343 = vmatpush1.msra.mxu0 0.0
        %344 = vmatprep.subr.mxu0 0.0
        %345 = vmatpush1.msra.mxu0 0.0
        %346 = vmatprep.subr.mxu0 0.0
        %347 = vmatpush1.msra.mxu0 0.0
        %348 = vmatprep.subr.mxu0 0.0
        %349 = vmatpush1.msra.mxu0 0.0
        %350 = vmatprep.subr.mxu0 0.0
        %351 = vmatpush1.msra.mxu0 0.0
        %352 = vmatprep.subr.mxu0 0.0
        %353 = vmatpush1.msra.mxu0 0.0
        %354 = vmatprep.subr.mxu0 0.0
        %355 = vmatpush1.msra.mxu0 0.0
        %356 = vmatprep.subr.mxu0 0.0
        %357 = vmatpush1.msra.mxu0 0.0
        %358 = vmatprep.subr.mxu0 0.0
        %359 = vmatpush1.msra.mxu0 0.0
        %360 = vmatprep.subr.mxu0 0.0
        %361 = vmatpush1.msra.mxu0 0.0
        %362 = vmatprep.subr.mxu0 0.0
        %363 = vmatpush1.msra.mxu0 0.0
        %364 = vmatprep.subr.mxu0 0.0
        %365 = vmatpush1.msra.mxu0 0.0
        %366 = vmatprep.subr.mxu0 0.0
        %367 = vmatpush1.msra.mxu0 0.0
        %368 = vmatprep.subr.mxu0 0.0
        %369 = vmatpush1.msra.mxu0 0.0
        %370 = vmatprep.mubr.f32.mxu0 0.0
        %371 = vmatmul.mubr.f32.gmra.mrb[0].mxu0 %v300
        %v372 = vpop.f32.mrb[0].mxu0
        %v373 = vadd.f32 %v297, %v372
        %v374 = vpop.f32.mrb[0].mxu0
        %375 = vdwg.mxu0
        %v376 = vxor.u32 %v373, 2147483648
        %v377 = vmul.f32 %v376, 1.442695
        %v378 = vpow.pop %v377
        %v379 = vadd.f32 %v378, 1.0
        %v380 = vrcp.pop %v379
        %v381 = vmul.f32 1.0, %v380
        %v382 = vld [vmem:[%s4] sm:$0xff]
        %v383 = vld [vmem:[%s4 + $0x8] sm:$0xff]
        %v384 = vld [vmem:[%s4 + $0x10] sm:$0xff]
        %v385 = vld [vmem:[%s4 + $0x18] sm:$0xff]
        %v386 = vld [vmem:[%s4 + $0x20] sm:$0xff]
        %v387 = vld [vmem:[%s4 + $0x28] sm:$0xff]
        %v388 = vld [vmem:[%s4 + $0x30] sm:$0xff]
        %v389 = vld [vmem:[%s4 + $0x38] sm:$0xff]
        %v390 = vld [vmem:[%s4 + $0x40] sm:$0xff]
        %v391 = vld [vmem:[%s4 + $0x48] sm:$0xff]
        %v392 = vld [vmem:[%s4 + $0x50] sm:$0xff]
        %v393 = vld [vmem:[%s4 + $0x58] sm:$0xff]
        %v394 = vld [vmem:[%s4 + $0x60] sm:$0xff]
        %v395 = vld [vmem:[%s4 + $0x68] sm:$0xff]
        %v396 = vld [vmem:[%s4 + $0x70] sm:$0xff]
        %v397 = vld [vmem:[%s4 + $0x78] sm:$0xff]
        %s399 = vtos %v381
        %v400 = vstv %s399
        %v402 = vmul.f32 %v400, %v382
        %v403 = vmul.f32 %v400, %v383
        %v404 = vmul.f32 %v400, %v384
        %v405 = vmul.f32 %v400, %v385
        %v406 = vmul.f32 %v400, %v386
        %v407 = vmul.f32 %v400, %v387
        %v408 = vmul.f32 %v400, %v388
        %v409 = vmul.f32 %v400, %v389
        %v410 = vmul.f32 %v400, %v390
        %v411 = vmul.f32 %v400, %v391
        %v412 = vmul.f32 %v400, %v392
        %v413 = vmul.f32 %v400, %v393
        %v414 = vmul.f32 %v400, %v394
        %v415 = vmul.f32 %v400, %v395
        %v416 = vmul.f32 %v400, %v396
        %v417 = vmul.f32 %v400, %v397
        %v418 = vadd.f32 %v402, 0.0
        %v419 = vadd.f32 %v403, 0.0
        %v420 = vadd.f32 %v404, 0.0
        %v421 = vadd.f32 %v405, 0.0
        %v422 = vadd.f32 %v406, 0.0
        %v423 = vadd.f32 %v407, 0.0
        %v424 = vadd.f32 %v408, 0.0
        %v425 = vadd.f32 %v409, 0.0
        %v426 = vadd.f32 %v410, 0.0
        %v427 = vadd.f32 %v411, 0.0
        %v428 = vadd.f32 %v412, 0.0
        %v429 = vadd.f32 %v413, 0.0
        %v430 = vadd.f32 %v414, 0.0
        %v431 = vadd.f32 %v415, 0.0
        %v432 = vadd.f32 %v416, 0.0
        %v433 = vadd.f32 %v417, 0.0
        %s434 = scalar_lea.vmem %s4, 128
        %v435 = vld [vmem:[%s434] sm:$0xff]
        %v436 = vld [vmem:[%s434 + $0x8] sm:$0xff]
        %v437 = vld [vmem:[%s434 + $0x10] sm:$0xff]
        %v438 = vld [vmem:[%s434 + $0x18] sm:$0xff]
        %v439 = vld [vmem:[%s434 + $0x20] sm:$0xff]
        %v440 = vld [vmem:[%s434 + $0x28] sm:$0xff]
        %v441 = vld [vmem:[%s434 + $0x30] sm:$0xff]
        %v442 = vld [vmem:[%s434 + $0x38] sm:$0xff]
        %v443 = vld [vmem:[%s434 + $0x40] sm:$0xff]
        %v444 = vld [vmem:[%s434 + $0x48] sm:$0xff]
        %v445 = vld [vmem:[%s434 + $0x50] sm:$0xff]
        %v446 = vld [vmem:[%s434 + $0x58] sm:$0xff]
        %v447 = vld [vmem:[%s434 + $0x60] sm:$0xff]
        %v448 = vld [vmem:[%s434 + $0x68] sm:$0xff]
        %v449 = vld [vmem:[%s434 + $0x70] sm:$0xff]
        %v450 = vld [vmem:[%s434 + $0x78] sm:$0xff]
        %v451 = vrot.slane %v381, 1
        %s452 = vtos %v451
        %v453 = vstv %s452
        %v455 = vmul.f32 %v453, %v435
        %v456 = vmul.f32 %v453, %v436
        %v457 = vmul.f32 %v453, %v437
        %v458 = vmul.f32 %v453, %v438
        %v459 = vmul.f32 %v453, %v439
        %v460 = vmul.f32 %v453, %v440
        %v461 = vmul.f32 %v453, %v441
        %v462 = vmul.f32 %v453, %v442
        %v463 = vmul.f32 %v453, %v443
        %v464 = vmul.f32 %v453, %v444
        %v465 = vmul.f32 %v453, %v445
        %v466 = vmul.f32 %v453, %v446
        %v467 = vmul.f32 %v453, %v447
        %v468 = vmul.f32 %v453, %v448
        %v469 = vmul.f32 %v453, %v449
        %v470 = vmul.f32 %v453, %v450
        %v471 = vadd.f32 %v418, %v455
        %v472 = vadd.f32 %v419, %v456
        %v473 = vadd.f32 %v420, %v457
        %v474 = vadd.f32 %v421, %v458
        %v475 = vadd.f32 %v422, %v459
        %v476 = vadd.f32 %v423, %v460
        %v477 = vadd.f32 %v424, %v461
        %v478 = vadd.f32 %v425, %v462
        %v479 = vadd.f32 %v426, %v463
        %v480 = vadd.f32 %v427, %v464
        %v481 = vadd.f32 %v428, %v465
        %v482 = vadd.f32 %v429, %v466
        %v483 = vadd.f32 %v430, %v467
        %v484 = vadd.f32 %v431, %v468
        %v485 = vadd.f32 %v432, %v469
        %v486 = vadd.f32 %v433, %v470
        %s487 = scalar_lea.vmem %s4, 256
        %v488 = vld [vmem:[%s487] sm:$0xff]
        %v489 = vld [vmem:[%s487 + $0x8] sm:$0xff]
        %v490 = vld [vmem:[%s487 + $0x10] sm:$0xff]
        %v491 = vld [vmem:[%s487 + $0x18] sm:$0xff]
        %v492 = vld [vmem:[%s487 + $0x20] sm:$0xff]
        %v493 = vld [vmem:[%s487 + $0x28] sm:$0xff]
        %v494 = vld [vmem:[%s487 + $0x30] sm:$0xff]
        %v495 = vld [vmem:[%s487 + $0x38] sm:$0xff]
        %v496 = vld [vmem:[%s487 + $0x40] sm:$0xff]
        %v497 = vld [vmem:[%s487 + $0x48] sm:$0xff]
        %v498 = vld [vmem:[%s487 + $0x50] sm:$0xff]
        %v499 = vld [vmem:[%s487 + $0x58] sm:$0xff]
        %v500 = vld [vmem:[%s487 + $0x60] sm:$0xff]
        %v501 = vld [vmem:[%s487 + $0x68] sm:$0xff]
        %v502 = vld [vmem:[%s487 + $0x70] sm:$0xff]
        %v503 = vld [vmem:[%s487 + $0x78] sm:$0xff]
        %v504 = vrot.slane %v381, 2
        %s505 = vtos %v504
        %v506 = vstv %s505
        %v508 = vmul.f32 %v506, %v488
        %v509 = vmul.f32 %v506, %v489
        %v510 = vmul.f32 %v506, %v490
        %v511 = vmul.f32 %v506, %v491
        %v512 = vmul.f32 %v506, %v492
        %v513 = vmul.f32 %v506, %v493
        %v514 = vmul.f32 %v506, %v494
        %v515 = vmul.f32 %v506, %v495
        %v516 = vmul.f32 %v506, %v496
        %v517 = vmul.f32 %v506, %v497
        %v518 = vmul.f32 %v506, %v498
        %v519 = vmul.f32 %v506, %v499
        %v520 = vmul.f32 %v506, %v500
        %v521 = vmul.f32 %v506, %v501
        %v522 = vmul.f32 %v506, %v502
        %v523 = vmul.f32 %v506, %v503
        %v524 = vadd.f32 %v471, %v508
        %v525 = vadd.f32 %v472, %v509
        %v526 = vadd.f32 %v473, %v510
        %v527 = vadd.f32 %v474, %v511
        %v528 = vadd.f32 %v475, %v512
        %v529 = vadd.f32 %v476, %v513
        %v530 = vadd.f32 %v477, %v514
        %v531 = vadd.f32 %v478, %v515
        %v532 = vadd.f32 %v479, %v516
        %v533 = vadd.f32 %v480, %v517
        %v534 = vadd.f32 %v481, %v518
        %v535 = vadd.f32 %v482, %v519
        %v536 = vadd.f32 %v483, %v520
        %v537 = vadd.f32 %v484, %v521
        %v538 = vadd.f32 %v485, %v522
        %v539 = vadd.f32 %v486, %v523
        %v541 = vcombine.high %v294, %v294
        %543 = vrot.lane.b32.xlu0 %v294, 17
        %v544 = vpop.permute.xlu0 %543
        %545 = vrot.lane.b32.xlu0 %v541, 17
        %v546 = vpop.permute.xlu0 %545
        %v547 = vlaneseq
        %v548 = vand.u32 %v547, 127
        %vm549 = vcmp.lt.s32.totalorder %v548, 17
        %v550 = vsel %vm549, %v544, %v546
        %v551 = vsel %vm549, %v546, %v544
        %v552 = vld [vmem:[%s6] ss:$8 sm:$0x3]
        %v554 = vlaneseq
        %v555 = vshrl.u32 %v554, 7
        %v556 = vsub.s32 0, %v555
        %v557 = vrot.slane %v552, %v556
        %v558 = vlaneseq
        %v559 = vshrl.u32 %v558, 7
        %v560 = vsub.s32 1, %v559
        %v561 = vrot.slane %v552, %v560
        %v564 = vmul.f32 %v551, %v557
        %v565 = vmul.f32 %v550, %v561
        %566 = vrot.lane.b32.xlu0 %v294, 16
        %v567 = vpop.permute.xlu0 %566
        %568 = vrot.lane.b32.xlu0 %v541, 16
        %v569 = vpop.permute.xlu0 %568
        %vm570 = vcmp.lt.s32.totalorder %v548, 16
        %v571 = vsel %vm570, %v567, %v569
        %v572 = vsel %vm570, %v569, %v567
        %s573 = scalar_lea.vmem %s6, 1
        %v574 = vld [vmem:[%s573] ss:$8 sm:$0x3]
        %v576 = vlaneseq
        %v577 = vshrl.u32 %v576, 7
        %v578 = vsub.s32 0, %v577
        %v579 = vrot.slane %v574, %v578
        %v580 = vlaneseq
        %v581 = vshrl.u32 %v580, 7
        %v582 = vsub.s32 1, %v581
        %v583 = vrot.slane %v574, %v582
        %v586 = vmul.f32 %v572, %v579
        %v587 = vmul.f32 %v571, %v583
        %588 = vrot.lane.b32.xlu0 %v294, 15
        %v589 = vpop.permute.xlu0 %588
        %590 = vrot.lane.b32.xlu0 %v541, 15
        %v591 = vpop.permute.xlu0 %590
        %vm592 = vcmp.lt.s32.totalorder %v548, 15
        %v593 = vsel %vm592, %v589, %v591
        %v594 = vsel %vm592, %v591, %v589
        %s595 = scalar_lea.vmem %s6, 2
        %v596 = vld [vmem:[%s595] ss:$8 sm:$0x3]
        %v598 = vlaneseq
        %v599 = vshrl.u32 %v598, 7
        %v600 = vsub.s32 0, %v599
        %v601 = vrot.slane %v596, %v600
        %v602 = vlaneseq
        %v603 = vshrl.u32 %v602, 7
        %v604 = vsub.s32 1, %v603
        %v605 = vrot.slane %v596, %v604
        %v608 = vmul.f32 %v594, %v601
        %v609 = vmul.f32 %v593, %v605
        %610 = vrot.lane.b32.xlu0 %v294, 1
        %v611 = vpop.permute.xlu0 %610
        %612 = vrot.lane.b32.xlu0 %v541, 1
        %v613 = vpop.permute.xlu0 %612
        %vm614 = vcmp.lt.s32.totalorder %v548, 1
        %v615 = vsel %vm614, %v611, %v613
        %v616 = vsel %vm614, %v613, %v611
        %s617 = scalar_lea.vmem %s6, 3
        %v618 = vld [vmem:[%s617] ss:$8 sm:$0x3]
        %v620 = vlaneseq
        %v621 = vshrl.u32 %v620, 7
        %v622 = vsub.s32 0, %v621
        %v623 = vrot.slane %v618, %v622
        %v624 = vlaneseq
        %v625 = vshrl.u32 %v624, 7
        %v626 = vsub.s32 1, %v625
        %v627 = vrot.slane %v618, %v626
        %v630 = vmul.f32 %v616, %v623
        %v631 = vmul.f32 %v615, %v627
        %632 = vrot.lane.b32.xlu0 %v294, 127
        %v633 = vpop.permute.xlu0 %632
        %634 = vrot.lane.b32.xlu0 %v541, 127
        %v635 = vpop.permute.xlu0 %634
        %vm636 = vcmp.lt.s32.totalorder %v548, 127
        %v637 = vsel %vm636, %v633, %v635
        %v638 = vsel %vm636, %v635, %v633
        %s639 = scalar_lea.vmem %s6, 5
        %v640 = vld [vmem:[%s639] ss:$8 sm:$0x3]
        %v642 = vlaneseq
        %v643 = vshrl.u32 %v642, 7
        %v644 = vsub.s32 0, %v643
        %v645 = vrot.slane %v640, %v644
        %v646 = vlaneseq
        %v647 = vshrl.u32 %v646, 7
        %v648 = vsub.s32 1, %v647
        %v649 = vrot.slane %v640, %v648
        %v652 = vmul.f32 %v637, %v645
        %v653 = vmul.f32 %v638, %v649
        %654 = vrot.lane.b32.xlu0 %v294, 113
        %v655 = vpop.permute.xlu0 %654
        %656 = vrot.lane.b32.xlu0 %v541, 113
        %v657 = vpop.permute.xlu0 %656
        %vm658 = vcmp.lt.s32.totalorder %v548, 113
        %v659 = vsel %vm658, %v655, %v657
        %v660 = vsel %vm658, %v657, %v655
        %s661 = scalar_lea.vmem %s6, 6
        %v662 = vld [vmem:[%s661] ss:$8 sm:$0x3]
        %v664 = vlaneseq
        %v665 = vshrl.u32 %v664, 7
        %v666 = vsub.s32 0, %v665
        %v667 = vrot.slane %v662, %v666
        %v668 = vlaneseq
        %v669 = vshrl.u32 %v668, 7
        %v670 = vsub.s32 1, %v669
        %v671 = vrot.slane %v662, %v670
        %v674 = vmul.f32 %v659, %v667
        %v675 = vmul.f32 %v660, %v671
        %676 = vrot.lane.b32.xlu0 %v294, 112
        %v677 = vpop.permute.xlu0 %676
        %678 = vrot.lane.b32.xlu0 %v541, 112
        %v679 = vpop.permute.xlu0 %678
        %vm680 = vcmp.lt.s32.totalorder %v548, 112
        %v681 = vsel %vm680, %v677, %v679
        %v682 = vsel %vm680, %v679, %v677
        %s683 = scalar_lea.vmem %s6, 7
        %v684 = vld [vmem:[%s683] ss:$8 sm:$0x3]
        %v686 = vlaneseq
        %v687 = vshrl.u32 %v686, 7
        %v688 = vsub.s32 0, %v687
        %v689 = vrot.slane %v684, %v688
        %v690 = vlaneseq
        %v691 = vshrl.u32 %v690, 7
        %v692 = vsub.s32 1, %v691
        %v693 = vrot.slane %v684, %v692
        %v696 = vmul.f32 %v681, %v689
        %v697 = vmul.f32 %v682, %v693
        %698 = vrot.lane.b32.xlu0 %v294, 111
        %v699 = vpop.permute.xlu0 %698
        %700 = vrot.lane.b32.xlu0 %v541, 111
        %v701 = vpop.permute.xlu0 %700
        %vm702 = vcmp.lt.s32.totalorder %v548, 111
        %v703 = vsel %vm702, %v699, %v701
        %v704 = vsel %vm702, %v701, %v699
        %s705 = scalar_lea.vmem %s6, 16
        %v706 = vld [vmem:[%s705] ss:$8 sm:$0x3]
        %v708 = vlaneseq
        %v709 = vshrl.u32 %v708, 7
        %v710 = vsub.s32 0, %v709
        %v711 = vrot.slane %v706, %v710
        %v712 = vlaneseq
        %v713 = vshrl.u32 %v712, 7
        %v714 = vsub.s32 1, %v713
        %v715 = vrot.slane %v706, %v714
        %v718 = vmul.f32 %v703, %v711
        %v719 = vmul.f32 %v704, %v715
        %v721 = vsel %vm298, %v525, 0
        %v724 = vsel %vm302, %v586, 0
        %v727 = vsel %vm302, %v587, 0
        %729 = vmatprep.subr.mxu0 %v727
        %730 = vmatpush1.msra.mxu0 %v724
        %731 = vmatprep.subr.mxu0 0.0
        %732 = vmatpush1.msra.mxu0 0.0
        %733 = vmatprep.subr.mxu0 0.0
        %734 = vmatpush1.msra.mxu0 0.0
        %735 = vmatprep.subr.mxu0 0.0
        %736 = vmatpush1.msra.mxu0 0.0
        %737 = vmatprep.subr.mxu0 0.0
        %738 = vmatpush1.msra.mxu0 0.0
        %739 = vmatprep.subr.mxu0 0.0
        %740 = vmatpush1.msra.mxu0 0.0
        %741 = vmatprep.subr.mxu0 0.0
        %742 = vmatpush1.msra.mxu0 0.0
        %743 = vmatprep.subr.mxu0 0.0
        %744 = vmatpush1.msra.mxu0 0.0
        %745 = vmatprep.subr.mxu0 0.0
        %746 = vmatpush1.msra.mxu0 0.0
        %747 = vmatprep.subr.mxu0 0.0
        %748 = vmatpush1.msra.mxu0 0.0
        %749 = vmatprep.subr.mxu0 0.0
        %750 = vmatpush1.msra.mxu0 0.0
        %751 = vmatprep.subr.mxu0 0.0
        %752 = vmatpush1.msra.mxu0 0.0
        %753 = vmatprep.subr.mxu0 0.0
        %754 = vmatpush1.msra.mxu0 0.0
        %755 = vmatprep.subr.mxu0 0.0
        %756 = vmatpush1.msra.mxu0 0.0
        %757 = vmatprep.subr.mxu0 0.0
        %758 = vmatpush1.msra.mxu0 0.0
        %759 = vmatprep.subr.mxu0 0.0
        %760 = vmatpush1.msra.mxu0 0.0
        %761 = vmatprep.subr.mxu0 0.0
        %762 = vmatpush1.msra.mxu0 0.0
        %763 = vmatprep.subr.mxu0 0.0
        %764 = vmatpush1.msra.mxu0 0.0
        %765 = vmatprep.subr.mxu0 0.0
        %766 = vmatpush1.msra.mxu0 0.0
        %767 = vmatprep.subr.mxu0 0.0
        %768 = vmatpush1.msra.mxu0 0.0
        %769 = vmatprep.subr.mxu0 0.0
        %770 = vmatpush1.msra.mxu0 0.0
        %771 = vmatprep.subr.mxu0 0.0
        %772 = vmatpush1.msra.mxu0 0.0
        %773 = vmatprep.subr.mxu0 0.0
        %774 = vmatpush1.msra.mxu0 0.0
        %775 = vmatprep.subr.mxu0 0.0
        %776 = vmatpush1.msra.mxu0 0.0
        %777 = vmatprep.subr.mxu0 0.0
        %778 = vmatpush1.msra.mxu0 0.0
        %779 = vmatprep.subr.mxu0 0.0
        %780 = vmatpush1.msra.mxu0 0.0
        %781 = vmatprep.subr.mxu0 0.0
        %782 = vmatpush1.msra.mxu0 0.0
        %783 = vmatprep.subr.mxu0 0.0
        %784 = vmatpush1.msra.mxu0 0.0
        %785 = vmatprep.subr.mxu0 0.0
        %786 = vmatpush1.msra.mxu0 0.0
        %787 = vmatprep.subr.mxu0 0.0
        %788 = vmatpush1.msra.mxu0 0.0
        %789 = vmatprep.subr.mxu0 0.0
        %790 = vmatpush1.msra.mxu0 0.0
        %791 = vmatprep.subr.mxu0 0.0
        %792 = vmatpush1.msra.mxu0 0.0
        %793 = vmatprep.mubr.f32.mxu0 0.0
        %794 = vmatmul.mubr.f32.gmra.mrb[0].mxu0 %v721
        %v795 = vpop.f32.mrb[0].mxu0
        %v796 = vadd.f32 0.0, %v795
        %v797 = vpop.f32.mrb[0].mxu0
        %v798 = vadd.f32 0.0, %v797
        %799 = vdwg.mxu0
        %v801 = vsel %vm298, %v524, 0
        %v804 = vsel %vm302, %v564, 0
        %v807 = vsel %vm302, %v565, 0
        %809 = vmatprep.subr.mxu0 %v807
        %810 = vmatpush1.msra.mxu0 %v804
        %811 = vmatprep.subr.mxu0 0.0
        %812 = vmatpush1.msra.mxu0 0.0
        %813 = vmatprep.subr.mxu0 0.0
        %814 = vmatpush1.msra.mxu0 0.0
        %815 = vmatprep.subr.mxu0 0.0
        %816 = vmatpush1.msra.mxu0 0.0
        %817 = vmatprep.subr.mxu0 0.0
        %818 = vmatpush1.msra.mxu0 0.0
        %819 = vmatprep.subr.mxu0 0.0
        %820 = vmatpush1.msra.mxu0 0.0
        %821 = vmatprep.subr.mxu0 0.0
        %822 = vmatpush1.msra.mxu0 0.0
        %823 = vmatprep.subr.mxu0 0.0
        %824 = vmatpush1.msra.mxu0 0.0
        %825 = vmatprep.subr.mxu0 0.0
        %826 = vmatpush1.msra.mxu0 0.0
        %827 = vmatprep.subr.mxu0 0.0
        %828 = vmatpush1.msra.mxu0 0.0
        %829 = vmatprep.subr.mxu0 0.0
        %830 = vmatpush1.msra.mxu0 0.0
        %831 = vmatprep.subr.mxu0 0.0
        %832 = vmatpush1.msra.mxu0 0.0
        %833 = vmatprep.subr.mxu0 0.0
        %834 = vmatpush1.msra.mxu0 0.0
        %835 = vmatprep.subr.mxu0 0.0
        %836 = vmatpush1.msra.mxu0 0.0
        %837 = vmatprep.subr.mxu0 0.0
        %838 = vmatpush1.msra.mxu0 0.0
        %839 = vmatprep.subr.mxu0 0.0
        %840 = vmatpush1.msra.mxu0 0.0
        %841 = vmatprep.subr.mxu0 0.0
        %842 = vmatpush1.msra.mxu0 0.0
        %843 = vmatprep.subr.mxu0 0.0
        %844 = vmatpush1.msra.mxu0 0.0
        %845 = vmatprep.subr.mxu0 0.0
        %846 = vmatpush1.msra.mxu0 0.0
        %847 = vmatprep.subr.mxu0 0.0
        %848 = vmatpush1.msra.mxu0 0.0
        %849 = vmatprep.subr.mxu0 0.0
        %850 = vmatpush1.msra.mxu0 0.0
        %851 = vmatprep.subr.mxu0 0.0
        %852 = vmatpush1.msra.mxu0 0.0
        %853 = vmatprep.subr.mxu0 0.0
        %854 = vmatpush1.msra.mxu0 0.0
        %855 = vmatprep.subr.mxu0 0.0
        %856 = vmatpush1.msra.mxu0 0.0
        %857 = vmatprep.subr.mxu0 0.0
        %858 = vmatpush1.msra.mxu0 0.0
        %859 = vmatprep.subr.mxu0 0.0
        %860 = vmatpush1.msra.mxu0 0.0
        %861 = vmatprep.subr.mxu0 0.0
        %862 = vmatpush1.msra.mxu0 0.0
        %863 = vmatprep.subr.mxu0 0.0
        %864 = vmatpush1.msra.mxu0 0.0
        %865 = vmatprep.subr.mxu0 0.0
        %866 = vmatpush1.msra.mxu0 0.0
        %867 = vmatprep.subr.mxu0 0.0
        %868 = vmatpush1.msra.mxu0 0.0
        %869 = vmatprep.subr.mxu0 0.0
        %870 = vmatpush1.msra.mxu0 0.0
        %871 = vmatprep.subr.mxu0 0.0
        %872 = vmatpush1.msra.mxu0 0.0
        %873 = vmatprep.mubr.f32.mxu0 0.0
        %874 = vmatmul.mubr.f32.gmra.mrb[0].mxu0 %v801
        %v875 = vpop.f32.mrb[0].mxu0
        %v876 = vadd.f32 %v796, %v875
        %v877 = vpop.f32.mrb[0].mxu0
        %v878 = vadd.f32 %v798, %v877
        %879 = vdwg.mxu0
        %v881 = vsel %vm298, %v526, 0
        %v884 = vsel %vm302, %v630, 0
        %v887 = vsel %vm302, %v631, 0
        %889 = vmatprep.subr.mxu0 %v887
        %890 = vmatpush1.msra.mxu0 %v884
        %891 = vmatprep.subr.mxu0 0.0
        %892 = vmatpush1.msra.mxu0 0.0
        %893 = vmatprep.subr.mxu0 0.0
        %894 = vmatpush1.msra.mxu0 0.0
        %895 = vmatprep.subr.mxu0 0.0
        %896 = vmatpush1.msra.mxu0 0.0
        %897 = vmatprep.subr.mxu0 0.0
        %898 = vmatpush1.msra.mxu0 0.0
        %899 = vmatprep.subr.mxu0 0.0
        %900 = vmatpush1.msra.mxu0 0.0
        %901 = vmatprep.subr.mxu0 0.0
        %902 = vmatpush1.msra.mxu0 0.0
        %903 = vmatprep.subr.mxu0 0.0
        %904 = vmatpush1.msra.mxu0 0.0
        %905 = vmatprep.subr.mxu0 0.0
        %906 = vmatpush1.msra.mxu0 0.0
        %907 = vmatprep.subr.mxu0 0.0
        %908 = vmatpush1.msra.mxu0 0.0
        %909 = vmatprep.subr.mxu0 0.0
        %910 = vmatpush1.msra.mxu0 0.0
        %911 = vmatprep.subr.mxu0 0.0
        %912 = vmatpush1.msra.mxu0 0.0
        %913 = vmatprep.subr.mxu0 0.0
        %914 = vmatpush1.msra.mxu0 0.0
        %915 = vmatprep.subr.mxu0 0.0
        %916 = vmatpush1.msra.mxu0 0.0
        %917 = vmatprep.subr.mxu0 0.0
        %918 = vmatpush1.msra.mxu0 0.0
        %919 = vmatprep.subr.mxu0 0.0
        %920 = vmatpush1.msra.mxu0 0.0
        %921 = vmatprep.subr.mxu0 0.0
        %922 = vmatpush1.msra.mxu0 0.0
        %923 = vmatprep.subr.mxu0 0.0
        %924 = vmatpush1.msra.mxu0 0.0
        %925 = vmatprep.subr.mxu0 0.0
        %926 = vmatpush1.msra.mxu0 0.0
        %927 = vmatprep.subr.mxu0 0.0
        %928 = vmatpush1.msra.mxu0 0.0
        %929 = vmatprep.subr.mxu0 0.0
        %930 = vmatpush1.msra.mxu0 0.0
        %931 = vmatprep.subr.mxu0 0.0
        %932 = vmatpush1.msra.mxu0 0.0
        %933 = vmatprep.subr.mxu0 0.0
        %934 = vmatpush1.msra.mxu0 0.0
        %935 = vmatprep.subr.mxu0 0.0
        %936 = vmatpush1.msra.mxu0 0.0
        %937 = vmatprep.subr.mxu0 0.0
        %938 = vmatpush1.msra.mxu0 0.0
        %939 = vmatprep.subr.mxu0 0.0
        %940 = vmatpush1.msra.mxu0 0.0
        %941 = vmatprep.subr.mxu0 0.0
        %942 = vmatpush1.msra.mxu0 0.0
        %943 = vmatprep.subr.mxu0 0.0
        %944 = vmatpush1.msra.mxu0 0.0
        %945 = vmatprep.subr.mxu0 0.0
        %946 = vmatpush1.msra.mxu0 0.0
        %947 = vmatprep.subr.mxu0 0.0
        %948 = vmatpush1.msra.mxu0 0.0
        %949 = vmatprep.subr.mxu0 0.0
        %950 = vmatpush1.msra.mxu0 0.0
        %951 = vmatprep.subr.mxu0 0.0
        %952 = vmatpush1.msra.mxu0 0.0
        %953 = vmatprep.mubr.f32.mxu0 0.0
        %954 = vmatmul.mubr.f32.gmra.mrb[0].mxu0 %v881
        %v955 = vpop.f32.mrb[0].mxu0
        %v956 = vadd.f32 0.0, %v955
        %v957 = vpop.f32.mrb[0].mxu0
        %v958 = vadd.f32 0.0, %v957
        %959 = vdwg.mxu0
        %v960 = vadd.f32 %v876, %v956
        %v961 = vadd.f32 %v878, %v958
        %v963 = vsel %vm298, %v527, 0
        %v965 = vsel %vm302, %v294, 0
        %v967 = vsel %vm302, %v541, 0
        %969 = vmatprep.subr.mxu0 %v967
        %970 = vmatpush1.msra.mxu0 %v965
        %971 = vmatprep.subr.mxu0 0.0
        %972 = vmatpush1.msra.mxu0 0.0
        %973 = vmatprep.subr.mxu0 0.0
        %974 = vmatpush1.msra.mxu0 0.0
        %975 = vmatprep.subr.mxu0 0.0
        %976 = vmatpush1.msra.mxu0 0.0
        %977 = vmatprep.subr.mxu0 0.0
        %978 = vmatpush1.msra.mxu0 0.0
        %979 = vmatprep.subr.mxu0 0.0
        %980 = vmatpush1.msra.mxu0 0.0
        %981 = vmatprep.subr.mxu0 0.0
        %982 = vmatpush1.msra.mxu0 0.0
        %983 = vmatprep.subr.mxu0 0.0
        %984 = vmatpush1.msra.mxu0 0.0
        %985 = vmatprep.subr.mxu0 0.0
        %986 = vmatpush1.msra.mxu0 0.0
        %987 = vmatprep.subr.mxu0 0.0
        %988 = vmatpush1.msra.mxu0 0.0
        %989 = vmatprep.subr.mxu0 0.0
        %990 = vmatpush1.msra.mxu0 0.0
        %991 = vmatprep.subr.mxu0 0.0
        %992 = vmatpush1.msra.mxu0 0.0
        %993 = vmatprep.subr.mxu0 0.0
        %994 = vmatpush1.msra.mxu0 0.0
        %995 = vmatprep.subr.mxu0 0.0
        %996 = vmatpush1.msra.mxu0 0.0
        %997 = vmatprep.subr.mxu0 0.0
        %998 = vmatpush1.msra.mxu0 0.0
        %999 = vmatprep.subr.mxu0 0.0
        %1000 = vmatpush1.msra.mxu0 0.0
        %1001 = vmatprep.subr.mxu0 0.0
        %1002 = vmatpush1.msra.mxu0 0.0
        %1003 = vmatprep.subr.mxu0 0.0
        %1004 = vmatpush1.msra.mxu0 0.0
        %1005 = vmatprep.subr.mxu0 0.0
        %1006 = vmatpush1.msra.mxu0 0.0
        %1007 = vmatprep.subr.mxu0 0.0
        %1008 = vmatpush1.msra.mxu0 0.0
        %1009 = vmatprep.subr.mxu0 0.0
        %1010 = vmatpush1.msra.mxu0 0.0
        %1011 = vmatprep.subr.mxu0 0.0
        %1012 = vmatpush1.msra.mxu0 0.0
        %1013 = vmatprep.subr.mxu0 0.0
        %1014 = vmatpush1.msra.mxu0 0.0
        %1015 = vmatprep.subr.mxu0 0.0
        %1016 = vmatpush1.msra.mxu0 0.0
        %1017 = vmatprep.subr.mxu0 0.0
        %1018 = vmatpush1.msra.mxu0 0.0
        %1019 = vmatprep.subr.mxu0 0.0
        %1020 = vmatpush1.msra.mxu0 0.0
        %1021 = vmatprep.subr.mxu0 0.0
        %1022 = vmatpush1.msra.mxu0 0.0
        %1023 = vmatprep.subr.mxu0 0.0
        %1024 = vmatpush1.msra.mxu0 0.0
        %1025 = vmatprep.subr.mxu0 0.0
        %1026 = vmatpush1.msra.mxu0 0.0
        %1027 = vmatprep.subr.mxu0 0.0
        %1028 = vmatpush1.msra.mxu0 0.0
        %1029 = vmatprep.subr.mxu0 0.0
        %1030 = vmatpush1.msra.mxu0 0.0
        %1031 = vmatprep.subr.mxu0 0.0
        %1032 = vmatpush1.msra.mxu0 0.0
        %1033 = vmatprep.mubr.f32.mxu0 0.0
        %1034 = vmatmul.mubr.f32.gmra.mrb[0].mxu0 %v963
        %v1035 = vpop.f32.mrb[0].mxu0
        %v1036 = vadd.f32 0.0, %v1035
        %v1037 = vpop.f32.mrb[0].mxu0
        %v1038 = vadd.f32 0.0, %v1037
        %1039 = vdwg.mxu0
        %v1040 = vadd.f32 %v960, %v1036
        %v1041 = vadd.f32 %v961, %v1038
        %v1042 = vld [vmem:[%s5] sm:$0xff]
        %1044 = vset.pattern.permute.xlu0 0
        %1045 = vperm.xlu0 %1044, %v1042
        %v1046 = vpop.permute.xlu0 %1045
        %v1048 = vadd.f32 %v1040, %v1046
        %v1049 = vadd.f32 %v1041, %v1046
        %v1050 = vmax.f32 %v1048, 0.0
        %v1051 = vmax.f32 %v1049, 0.0
        %1052 = vst [vmem:[%s284] sm:$0xff] %v1050
        %1053 = vst [vmem:[%s284 + $0x8] sm:$0xff] %v1051
        %v1055 = vsel %vm298, %v529, 0
        %v1058 = vsel %vm302, %v608, 0
        %v1061 = vsel %vm302, %v609, 0
        %1063 = vmatprep.subr.mxu0 %v1061
        %1064 = vmatpush1.msra.mxu0 %v1058
        %1065 = vmatprep.subr.mxu0 0.0
        %1066 = vmatpush1.msra.mxu0 0.0
        %1067 = vmatprep.subr.mxu0 0.0
        %1068 = vmatpush1.msra.mxu0 0.0
        %1069 = vmatprep.subr.mxu0 0.0
        %1070 = vmatpush1.msra.mxu0 0.0
        %1071 = vmatprep.subr.mxu0 0.0
        %1072 = vmatpush1.msra.mxu0 0.0
        %1073 = vmatprep.subr.mxu0 0.0
        %1074 = vmatpush1.msra.mxu0 0.0
        %1075 = vmatprep.subr.mxu0 0.0
        %1076 = vmatpush1.msra.mxu0 0.0
        %1077 = vmatprep.subr.mxu0 0.0
        %1078 = vmatpush1.msra.mxu0 0.0
        %1079 = vmatprep.subr.mxu0 0.0
        %1080 = vmatpush1.msra.mxu0 0.0
        %1081 = vmatprep.subr.mxu0 0.0
        %1082 = vmatpush1.msra.mxu0 0.0
        %1083 = vmatprep.subr.mxu0 0.0
        %1084 = vmatpush1.msra.mxu0 0.0
        %1085 = vmatprep.subr.mxu0 0.0
        %1086 = vmatpush1.msra.mxu0 0.0
        %1087 = vmatprep.subr.mxu0 0.0
        %1088 = vmatpush1.msra.mxu0 0.0
        %1089 = vmatprep.subr.mxu0 0.0
        %1090 = vmatpush1.msra.mxu0 0.0
        %1091 = vmatprep.subr.mxu0 0.0
        %1092 = vmatpush1.msra.mxu0 0.0
        %1093 = vmatprep.subr.mxu0 0.0
        %1094 = vmatpush1.msra.mxu0 0.0
        %1095 = vmatprep.subr.mxu0 0.0
        %1096 = vmatpush1.msra.mxu0 0.0
        %1097 = vmatprep.subr.mxu0 0.0
        %1098 = vmatpush1.msra.mxu0 0.0
        %1099 = vmatprep.subr.mxu0 0.0
        %1100 = vmatpush1.msra.mxu0 0.0
        %1101 = vmatprep.subr.mxu0 0.0
        %1102 = vmatpush1.msra.mxu0 0.0
        %1103 = vmatprep.subr.mxu0 0.0
        %1104 = vmatpush1.msra.mxu0 0.0
        %1105 = vmatprep.subr.mxu0 0.0
        %1106 = vmatpush1.msra.mxu0 0.0
        %1107 = vmatprep.subr.mxu0 0.0
        %1108 = vmatpush1.msra.mxu0 0.0
        %1109 = vmatprep.subr.mxu0 0.0
        %1110 = vmatpush1.msra.mxu0 0.0
        %1111 = vmatprep.subr.mxu0 0.0
        %1112 = vmatpush1.msra.mxu0 0.0
        %1113 = vmatprep.subr.mxu0 0.0
        %1114 = vmatpush1.msra.mxu0 0.0
        %1115 = vmatprep.subr.mxu0 0.0
        %1116 = vmatpush1.msra.mxu0 0.0
        %1117 = vmatprep.subr.mxu0 0.0
        %1118 = vmatpush1.msra.mxu0 0.0
        %1119 = vmatprep.subr.mxu0 0.0
        %1120 = vmatpush1.msra.mxu0 0.0
        %1121 = vmatprep.subr.mxu0 0.0
        %1122 = vmatpush1.msra.mxu0 0.0
        %1123 = vmatprep.subr.mxu0 0.0
        %1124 = vmatpush1.msra.mxu0 0.0
        %1125 = vmatprep.subr.mxu0 0.0
        %1126 = vmatpush1.msra.mxu0 0.0
        %1127 = vmatprep.mubr.f32.mxu0 0.0
        %1128 = vmatmul.mubr.f32.gmra.mrb[0].mxu0 %v1055
        %v1129 = vpop.f32.mrb[0].mxu0
        %v1130 = vadd.f32 0.0, %v1129
        %v1131 = vpop.f32.mrb[0].mxu0
        %v1132 = vadd.f32 0.0, %v1131
        %1133 = vdwg.mxu0
        %v1135 = vsel %vm298, %v528, 0
        %1137 = vmatprep.subr.mxu0 %v727
        %1138 = vmatpush1.msra.mxu0 %v724
        %1139 = vmatprep.subr.mxu0 0.0
        %1140 = vmatpush1.msra.mxu0 0.0
        %1141 = vmatprep.subr.mxu0 0.0
        %1142 = vmatpush1.msra.mxu0 0.0
        %1143 = vmatprep.subr.mxu0 0.0
        %1144 = vmatpush1.msra.mxu0 0.0
        %1145 = vmatprep.subr.mxu0 0.0
        %1146 = vmatpush1.msra.mxu0 0.0
        %1147 = vmatprep.subr.mxu0 0.0
        %1148 = vmatpush1.msra.mxu0 0.0
        %1149 = vmatprep.subr.mxu0 0.0
        %1150 = vmatpush1.msra.mxu0 0.0
        %1151 = vmatprep.subr.mxu0 0.0
        %1152 = vmatpush1.msra.mxu0 0.0
        %1153 = vmatprep.subr.mxu0 0.0
        %1154 = vmatpush1.msra.mxu0 0.0
        %1155 = vmatprep.subr.mxu0 0.0
        %1156 = vmatpush1.msra.mxu0 0.0
        %1157 = vmatprep.subr.mxu0 0.0
        %1158 = vmatpush1.msra.mxu0 0.0
        %1159 = vmatprep.subr.mxu0 0.0
        %1160 = vmatpush1.msra.mxu0 0.0
        %1161 = vmatprep.subr.mxu0 0.0
        %1162 = vmatpush1.msra.mxu0 0.0
        %1163 = vmatprep.subr.mxu0 0.0
        %1164 = vmatpush1.msra.mxu0 0.0
        %1165 = vmatprep.subr.mxu0 0.0
        %1166 = vmatpush1.msra.mxu0 0.0
        %1167 = vmatprep.subr.mxu0 0.0
        %1168 = vmatpush1.msra.mxu0 0.0
        %1169 = vmatprep.subr.mxu0 0.0
        %1170 = vmatpush1.msra.mxu0 0.0
        %1171 = vmatprep.subr.mxu0 0.0
        %1172 = vmatpush1.msra.mxu0 0.0
        %1173 = vmatprep.subr.mxu0 0.0
        %1174 = vmatpush1.msra.mxu0 0.0
        %1175 = vmatprep.subr.mxu0 0.0
        %1176 = vmatpush1.msra.mxu0 0.0
        %1177 = vmatprep.subr.mxu0 0.0
        %1178 = vmatpush1.msra.mxu0 0.0
        %1179 = vmatprep.subr.mxu0 0.0
        %1180 = vmatpush1.msra.mxu0 0.0
        %1181 = vmatprep.subr.mxu0 0.0
        %1182 = vmatpush1.msra.mxu0 0.0
        %1183 = vmatprep.subr.mxu0 0.0
        %1184 = vmatpush1.msra.mxu0 0.0
        %1185 = vmatprep.subr.mxu0 0.0
        %1186 = vmatpush1.msra.mxu0 0.0
        %1187 = vmatprep.subr.mxu0 0.0
        %1188 = vmatpush1.msra.mxu0 0.0
        %1189 = vmatprep.subr.mxu0 0.0
        %1190 = vmatpush1.msra.mxu0 0.0
        %1191 = vmatprep.subr.mxu0 0.0
        %1192 = vmatpush1.msra.mxu0 0.0
        %1193 = vmatprep.subr.mxu0 0.0
        %1194 = vmatpush1.msra.mxu0 0.0
        %1195 = vmatprep.subr.mxu0 0.0
        %1196 = vmatpush1.msra.mxu0 0.0
        %1197 = vmatprep.subr.mxu0 0.0
        %1198 = vmatpush1.msra.mxu0 0.0
        %1199 = vmatprep.subr.mxu0 0.0
        %1200 = vmatpush1.msra.mxu0 0.0
        %1201 = vmatprep.mubr.f32.mxu0 0.0
        %1202 = vmatmul.mubr.f32.gmra.mrb[0].mxu0 %v1135
        %v1203 = vpop.f32.mrb[0].mxu0
        %v1204 = vadd.f32 %v1130, %v1203
        %v1205 = vpop.f32.mrb[0].mxu0
        %v1206 = vadd.f32 %v1132, %v1205
        %1207 = vdwg.mxu0
        %v1209 = vsel %vm298, %v530, 0
        %1211 = vmatprep.subr.mxu0 %v967
        %1212 = vmatpush1.msra.mxu0 %v965
        %1213 = vmatprep.subr.mxu0 0.0
        %1214 = vmatpush1.msra.mxu0 0.0
        %1215 = vmatprep.subr.mxu0 0.0
        %1216 = vmatpush1.msra.mxu0 0.0
        %1217 = vmatprep.subr.mxu0 0.0
        %1218 = vmatpush1.msra.mxu0 0.0
        %1219 = vmatprep.subr.mxu0 0.0
        %1220 = vmatpush1.msra.mxu0 0.0
        %1221 = vmatprep.subr.mxu0 0.0
        %1222 = vmatpush1.msra.mxu0 0.0
        %1223 = vmatprep.subr.mxu0 0.0
        %1224 = vmatpush1.msra.mxu0 0.0
        %1225 = vmatprep.subr.mxu0 0.0
        %1226 = vmatpush1.msra.mxu0 0.0
        %1227 = vmatprep.subr.mxu0 0.0
        %1228 = vmatpush1.msra.mxu0 0.0
        %1229 = vmatprep.subr.mxu0 0.0
        %1230 = vmatpush1.msra.mxu0 0.0
        %1231 = vmatprep.subr.mxu0 0.0
        %1232 = vmatpush1.msra.mxu0 0.0
        %1233 = vmatprep.subr.mxu0 0.0
        %1234 = vmatpush1.msra.mxu0 0.0
        %1235 = vmatprep.subr.mxu0 0.0
        %1236 = vmatpush1.msra.mxu0 0.0
        %1237 = vmatprep.subr.mxu0 0.0
        %1238 = vmatpush1.msra.mxu0 0.0
        %1239 = vmatprep.subr.mxu0 0.0
        %1240 = vmatpush1.msra.mxu0 0.0
        %1241 = vmatprep.subr.mxu0 0.0
        %1242 = vmatpush1.msra.mxu0 0.0
        %1243 = vmatprep.subr.mxu0 0.0
        %1244 = vmatpush1.msra.mxu0 0.0
        %1245 = vmatprep.subr.mxu0 0.0
        %1246 = vmatpush1.msra.mxu0 0.0
        %1247 = vmatprep.subr.mxu0 0.0
        %1248 = vmatpush1.msra.mxu0 0.0
        %1249 = vmatprep.subr.mxu0 0.0
        %1250 = vmatpush1.msra.mxu0 0.0
        %1251 = vmatprep.subr.mxu0 0.0
        %1252 = vmatpush1.msra.mxu0 0.0
        %1253 = vmatprep.subr.mxu0 0.0
        %1254 = vmatpush1.msra.mxu0 0.0
        %1255 = vmatprep.subr.mxu0 0.0
        %1256 = vmatpush1.msra.mxu0 0.0
        %1257 = vmatprep.subr.mxu0 0.0
        %1258 = vmatpush1.msra.mxu0 0.0
        %1259 = vmatprep.subr.mxu0 0.0
        %1260 = vmatpush1.msra.mxu0 0.0
        %1261 = vmatprep.subr.mxu0 0.0
        %1262 = vmatpush1.msra.mxu0 0.0
        %1263 = vmatprep.subr.mxu0 0.0
        %1264 = vmatpush1.msra.mxu0 0.0
        %1265 = vmatprep.subr.mxu0 0.0
        %1266 = vmatpush1.msra.mxu0 0.0
        %1267 = vmatprep.subr.mxu0 0.0
        %1268 = vmatpush1.msra.mxu0 0.0
        %1269 = vmatprep.subr.mxu0 0.0
        %1270 = vmatpush1.msra.mxu0 0.0
        %1271 = vmatprep.subr.mxu0 0.0
        %1272 = vmatpush1.msra.mxu0 0.0
        %1273 = vmatprep.subr.mxu0 0.0
        %1274 = vmatpush1.msra.mxu0 0.0
        %1275 = vmatprep.mubr.f32.mxu0 0.0
        %1276 = vmatmul.mubr.f32.gmra.mrb[0].mxu0 %v1209
        %v1277 = vpop.f32.mrb[0].mxu0
        %v1278 = vadd.f32 0.0, %v1277
        %v1279 = vpop.f32.mrb[0].mxu0
        %v1280 = vadd.f32 0.0, %v1279
        %1281 = vdwg.mxu0
        %v1282 = vadd.f32 %v1204, %v1278
        %v1283 = vadd.f32 %v1206, %v1280
        %v1285 = vsel %vm298, %v531, 0
        %v1288 = vsel %vm302, %v652, 0
        %v1291 = vsel %vm302, %v653, 0
        %1293 = vmatprep.subr.mxu0 %v1291
        %1294 = vmatpush1.msra.mxu0 %v1288
        %1295 = vmatprep.subr.mxu0 0.0
        %1296 = vmatpush1.msra.mxu0 0.0
        %1297 = vmatprep.subr.mxu0 0.0
        %1298 = vmatpush1.msra.mxu0 0.0
        %1299 = vmatprep.subr.mxu0 0.0
        %1300 = vmatpush1.msra.mxu0 0.0
        %1301 = vmatprep.subr.mxu0 0.0
        %1302 = vmatpush1.msra.mxu0 0.0
        %1303 = vmatprep.subr.mxu0 0.0
        %1304 = vmatpush1.msra.mxu0 0.0
        %1305 = vmatprep.subr.mxu0 0.0
        %1306 = vmatpush1.msra.mxu0 0.0
        %1307 = vmatprep.subr.mxu0 0.0
        %1308 = vmatpush1.msra.mxu0 0.0
        %1309 = vmatprep.subr.mxu0 0.0
        %1310 = vmatpush1.msra.mxu0 0.0
        %1311 = vmatprep.subr.mxu0 0.0
        %1312 = vmatpush1.msra.mxu0 0.0
        %1313 = vmatprep.subr.mxu0 0.0
        %1314 = vmatpush1.msra.mxu0 0.0
        %1315 = vmatprep.subr.mxu0 0.0
        %1316 = vmatpush1.msra.mxu0 0.0
        %1317 = vmatprep.subr.mxu0 0.0
        %1318 = vmatpush1.msra.mxu0 0.0
        %1319 = vmatprep.subr.mxu0 0.0
        %1320 = vmatpush1.msra.mxu0 0.0
        %1321 = vmatprep.subr.mxu0 0.0
        %1322 = vmatpush1.msra.mxu0 0.0
        %1323 = vmatprep.subr.mxu0 0.0
        %1324 = vmatpush1.msra.mxu0 0.0
        %1325 = vmatprep.subr.mxu0 0.0
        %1326 = vmatpush1.msra.mxu0 0.0
        %1327 = vmatprep.subr.mxu0 0.0
        %1328 = vmatpush1.msra.mxu0 0.0
        %1329 = vmatprep.subr.mxu0 0.0
        %1330 = vmatpush1.msra.mxu0 0.0
        %1331 = vmatprep.subr.mxu0 0.0
        %1332 = vmatpush1.msra.mxu0 0.0
        %1333 = vmatprep.subr.mxu0 0.0
        %1334 = vmatpush1.msra.mxu0 0.0
        %1335 = vmatprep.subr.mxu0 0.0
        %1336 = vmatpush1.msra.mxu0 0.0
        %1337 = vmatprep.subr.mxu0 0.0
        %1338 = vmatpush1.msra.mxu0 0.0
        %1339 = vmatprep.subr.mxu0 0.0
        %1340 = vmatpush1.msra.mxu0 0.0
        %1341 = vmatprep.subr.mxu0 0.0
        %1342 = vmatpush1.msra.mxu0 0.0
        %1343 = vmatprep.subr.mxu0 0.0
        %1344 = vmatpush1.msra.mxu0 0.0
        %1345 = vmatprep.subr.mxu0 0.0
        %1346 = vmatpush1.msra.mxu0 0.0
        %1347 = vmatprep.subr.mxu0 0.0
        %1348 = vmatpush1.msra.mxu0 0.0
        %1349 = vmatprep.subr.mxu0 0.0
        %1350 = vmatpush1.msra.mxu0 0.0
        %1351 = vmatprep.subr.mxu0 0.0
        %1352 = vmatpush1.msra.mxu0 0.0
        %1353 = vmatprep.subr.mxu0 0.0
        %1354 = vmatpush1.msra.mxu0 0.0
        %1355 = vmatprep.subr.mxu0 0.0
        %1356 = vmatpush1.msra.mxu0 0.0
        %1357 = vmatprep.mubr.f32.mxu0 0.0
        %1358 = vmatmul.mubr.f32.gmra.mrb[0].mxu0 %v1285
        %v1359 = vpop.f32.mrb[0].mxu0
        %v1360 = vadd.f32 0.0, %v1359
        %v1361 = vpop.f32.mrb[0].mxu0
        %v1362 = vadd.f32 0.0, %v1361
        %1363 = vdwg.mxu0
        %v1364 = vadd.f32 %v1282, %v1360
        %v1365 = vadd.f32 %v1283, %v1362
        %v1366 = vld [vmem:[%s5] sm:$0xff]
        %1368 = vset.pattern.permute.xlu0 0
        %1369 = vperm.xlu0 %1368, %v1366
        %v1370 = vpop.permute.xlu0 %1369
        %v1372 = vadd.f32 %v1364, %v1370
        %v1373 = vadd.f32 %v1365, %v1370
        %v1374 = vmax.f32 %v1372, 0.0
        %v1375 = vmax.f32 %v1373, 0.0
        %s1376 = scalar_lea.vmem %s284, 16 [#allocation2]
        %1377 = vst [vmem:[%s1376] sm:$0xff] %v1374
        %1378 = vst [vmem:[%s1376 + $0x8] sm:$0xff] %v1375
        %v1380 = vsel %vm298, %v533, 0
        %1382 = vmatprep.subr.mxu0 %v967
        %1383 = vmatpush1.msra.mxu0 %v965
        %1384 = vmatprep.subr.mxu0 0.0
        %1385 = vmatpush1.msra.mxu0 0.0
        %1386 = vmatprep.subr.mxu0 0.0
        %1387 = vmatpush1.msra.mxu0 0.0
        %1388 = vmatprep.subr.mxu0 0.0
        %1389 = vmatpush1.msra.mxu0 0.0
        %1390 = vmatprep.subr.mxu0 0.0
        %1391 = vmatpush1.msra.mxu0 0.0
        %1392 = vmatprep.subr.mxu0 0.0
        %1393 = vmatpush1.msra.mxu0 0.0
        %1394 = vmatprep.subr.mxu0 0.0
        %1395 = vmatpush1.msra.mxu0 0.0
        %1396 = vmatprep.subr.mxu0 0.0
        %1397 = vmatpush1.msra.mxu0 0.0
        %1398 = vmatprep.subr.mxu0 0.0
        %1399 = vmatpush1.msra.mxu0 0.0
        %1400 = vmatprep.subr.mxu0 0.0
        %1401 = vmatpush1.msra.mxu0 0.0
        %1402 = vmatprep.subr.mxu0 0.0
        %1403 = vmatpush1.msra.mxu0 0.0
        %1404 = vmatprep.subr.mxu0 0.0
        %1405 = vmatpush1.msra.mxu0 0.0
        %1406 = vmatprep.subr.mxu0 0.0
        %1407 = vmatpush1.msra.mxu0 0.0
        %1408 = vmatprep.subr.mxu0 0.0
        %1409 = vmatpush1.msra.mxu0 0.0
        %1410 = vmatprep.subr.mxu0 0.0
        %1411 = vmatpush1.msra.mxu0 0.0
        %1412 = vmatprep.subr.mxu0 0.0
        %1413 = vmatpush1.msra.mxu0 0.0
        %1414 = vmatprep.subr.mxu0 0.0
        %1415 = vmatpush1.msra.mxu0 0.0
        %1416 = vmatprep.subr.mxu0 0.0
        %1417 = vmatpush1.msra.mxu0 0.0
        %1418 = vmatprep.subr.mxu0 0.0
        %1419 = vmatpush1.msra.mxu0 0.0
        %1420 = vmatprep.subr.mxu0 0.0
        %1421 = vmatpush1.msra.mxu0 0.0
        %1422 = vmatprep.subr.mxu0 0.0
        %1423 = vmatpush1.msra.mxu0 0.0
        %1424 = vmatprep.subr.mxu0 0.0
        %1425 = vmatpush1.msra.mxu0 0.0
        %1426 = vmatprep.subr.mxu0 0.0
        %1427 = vmatpush1.msra.mxu0 0.0
        %1428 = vmatprep.subr.mxu0 0.0
        %1429 = vmatpush1.msra.mxu0 0.0
        %1430 = vmatprep.subr.mxu0 0.0
        %1431 = vmatpush1.msra.mxu0 0.0
        %1432 = vmatprep.subr.mxu0 0.0
        %1433 = vmatpush1.msra.mxu0 0.0
        %1434 = vmatprep.subr.mxu0 0.0
        %1435 = vmatpush1.msra.mxu0 0.0
        %1436 = vmatprep.subr.mxu0 0.0
        %1437 = vmatpush1.msra.mxu0 0.0
        %1438 = vmatprep.subr.mxu0 0.0
        %1439 = vmatpush1.msra.mxu0 0.0
        %1440 = vmatprep.subr.mxu0 0.0
        %1441 = vmatpush1.msra.mxu0 0.0
        %1442 = vmatprep.subr.mxu0 0.0
        %1443 = vmatpush1.msra.mxu0 0.0
        %1444 = vmatprep.subr.mxu0 0.0
        %1445 = vmatpush1.msra.mxu0 0.0
        %1446 = vmatprep.mubr.f32.mxu0 0.0
        %1447 = vmatmul.mubr.f32.gmra.mrb[0].mxu0 %v1380
        %v1448 = vpop.f32.mrb[0].mxu0
        %v1449 = vadd.f32 0.0, %v1448
        %v1450 = vpop.f32.mrb[0].mxu0
        %v1451 = vadd.f32 0.0, %v1450
        %1452 = vdwg.mxu0
        %v1454 = vsel %vm298, %v532, 0
        %1456 = vmatprep.subr.mxu0 %v887
        %1457 = vmatpush1.msra.mxu0 %v884
        %1458 = vmatprep.subr.mxu0 0.0
        %1459 = vmatpush1.msra.mxu0 0.0
        %1460 = vmatprep.subr.mxu0 0.0
        %1461 = vmatpush1.msra.mxu0 0.0
        %1462 = vmatprep.subr.mxu0 0.0
        %1463 = vmatpush1.msra.mxu0 0.0
        %1464 = vmatprep.subr.mxu0 0.0
        %1465 = vmatpush1.msra.mxu0 0.0
        %1466 = vmatprep.subr.mxu0 0.0
        %1467 = vmatpush1.msra.mxu0 0.0
        %1468 = vmatprep.subr.mxu0 0.0
        %1469 = vmatpush1.msra.mxu0 0.0
        %1470 = vmatprep.subr.mxu0 0.0
        %1471 = vmatpush1.msra.mxu0 0.0
        %1472 = vmatprep.subr.mxu0 0.0
        %1473 = vmatpush1.msra.mxu0 0.0
        %1474 = vmatprep.subr.mxu0 0.0
        %1475 = vmatpush1.msra.mxu0 0.0
        %1476 = vmatprep.subr.mxu0 0.0
        %1477 = vmatpush1.msra.mxu0 0.0
        %1478 = vmatprep.subr.mxu0 0.0
        %1479 = vmatpush1.msra.mxu0 0.0
        %1480 = vmatprep.subr.mxu0 0.0
        %1481 = vmatpush1.msra.mxu0 0.0
        %1482 = vmatprep.subr.mxu0 0.0
        %1483 = vmatpush1.msra.mxu0 0.0
        %1484 = vmatprep.subr.mxu0 0.0
        %1485 = vmatpush1.msra.mxu0 0.0
        %1486 = vmatprep.subr.mxu0 0.0
        %1487 = vmatpush1.msra.mxu0 0.0
        %1488 = vmatprep.subr.mxu0 0.0
        %1489 = vmatpush1.msra.mxu0 0.0
        %1490 = vmatprep.subr.mxu0 0.0
        %1491 = vmatpush1.msra.mxu0 0.0
        %1492 = vmatprep.subr.mxu0 0.0
        %1493 = vmatpush1.msra.mxu0 0.0
        %1494 = vmatprep.subr.mxu0 0.0
        %1495 = vmatpush1.msra.mxu0 0.0
        %1496 = vmatprep.subr.mxu0 0.0
        %1497 = vmatpush1.msra.mxu0 0.0
        %1498 = vmatprep.subr.mxu0 0.0
        %1499 = vmatpush1.msra.mxu0 0.0
        %1500 = vmatprep.subr.mxu0 0.0
        %1501 = vmatpush1.msra.mxu0 0.0
        %1502 = vmatprep.subr.mxu0 0.0
        %1503 = vmatpush1.msra.mxu0 0.0
        %1504 = vmatprep.subr.mxu0 0.0
        %1505 = vmatpush1.msra.mxu0 0.0
        %1506 = vmatprep.subr.mxu0 0.0
        %1507 = vmatpush1.msra.mxu0 0.0
        %1508 = vmatprep.subr.mxu0 0.0
        %1509 = vmatpush1.msra.mxu0 0.0
        %1510 = vmatprep.subr.mxu0 0.0
        %1511 = vmatpush1.msra.mxu0 0.0
        %1512 = vmatprep.subr.mxu0 0.0
        %1513 = vmatpush1.msra.mxu0 0.0
        %1514 = vmatprep.subr.mxu0 0.0
        %1515 = vmatpush1.msra.mxu0 0.0
        %1516 = vmatprep.subr.mxu0 0.0
        %1517 = vmatpush1.msra.mxu0 0.0
        %1518 = vmatprep.subr.mxu0 0.0
        %1519 = vmatpush1.msra.mxu0 0.0
        %1520 = vmatprep.mubr.f32.mxu0 0.0
        %1521 = vmatmul.mubr.f32.gmra.mrb[0].mxu0 %v1454
        %v1522 = vpop.f32.mrb[0].mxu0
        %v1523 = vadd.f32 %v1449, %v1522
        %v1524 = vpop.f32.mrb[0].mxu0
        %v1525 = vadd.f32 %v1451, %v1524
        %1526 = vdwg.mxu0
        %v1528 = vsel %vm298, %v534, 0
        %v1531 = vsel %vm302, %v674, 0
        %v1534 = vsel %vm302, %v675, 0
        %1536 = vmatprep.subr.mxu0 %v1534
        %1537 = vmatpush1.msra.mxu0 %v1531
        %1538 = vmatprep.subr.mxu0 0.0
        %1539 = vmatpush1.msra.mxu0 0.0
        %1540 = vmatprep.subr.mxu0 0.0
        %1541 = vmatpush1.msra.mxu0 0.0
        %1542 = vmatprep.subr.mxu0 0.0
        %1543 = vmatpush1.msra.mxu0 0.0
        %1544 = vmatprep.subr.mxu0 0.0
        %1545 = vmatpush1.msra.mxu0 0.0
        %1546 = vmatprep.subr.mxu0 0.0
        %1547 = vmatpush1.msra.mxu0 0.0
        %1548 = vmatprep.subr.mxu0 0.0
        %1549 = vmatpush1.msra.mxu0 0.0
        %1550 = vmatprep.subr.mxu0 0.0
        %1551 = vmatpush1.msra.mxu0 0.0
        %1552 = vmatprep.subr.mxu0 0.0
        %1553 = vmatpush1.msra.mxu0 0.0
        %1554 = vmatprep.subr.mxu0 0.0
        %1555 = vmatpush1.msra.mxu0 0.0
        %1556 = vmatprep.subr.mxu0 0.0
        %1557 = vmatpush1.msra.mxu0 0.0
        %1558 = vmatprep.subr.mxu0 0.0
        %1559 = vmatpush1.msra.mxu0 0.0
        %1560 = vmatprep.subr.mxu0 0.0
        %1561 = vmatpush1.msra.mxu0 0.0
        %1562 = vmatprep.subr.mxu0 0.0
        %1563 = vmatpush1.msra.mxu0 0.0
        %1564 = vmatprep.subr.mxu0 0.0
        %1565 = vmatpush1.msra.mxu0 0.0
        %1566 = vmatprep.subr.mxu0 0.0
        %1567 = vmatpush1.msra.mxu0 0.0
        %1568 = vmatprep.subr.mxu0 0.0
        %1569 = vmatpush1.msra.mxu0 0.0
        %1570 = vmatprep.subr.mxu0 0.0
        %1571 = vmatpush1.msra.mxu0 0.0
        %1572 = vmatprep.subr.mxu0 0.0
        %1573 = vmatpush1.msra.mxu0 0.0
        %1574 = vmatprep.subr.mxu0 0.0
        %1575 = vmatpush1.msra.mxu0 0.0
        %1576 = vmatprep.subr.mxu0 0.0
        %1577 = vmatpush1.msra.mxu0 0.0
        %1578 = vmatprep.subr.mxu0 0.0
        %1579 = vmatpush1.msra.mxu0 0.0
        %1580 = vmatprep.subr.mxu0 0.0
        %1581 = vmatpush1.msra.mxu0 0.0
        %1582 = vmatprep.subr.mxu0 0.0
        %1583 = vmatpush1.msra.mxu0 0.0
        %1584 = vmatprep.subr.mxu0 0.0
        %1585 = vmatpush1.msra.mxu0 0.0
        %1586 = vmatprep.subr.mxu0 0.0
        %1587 = vmatpush1.msra.mxu0 0.0
        %1588 = vmatprep.subr.mxu0 0.0
        %1589 = vmatpush1.msra.mxu0 0.0
        %1590 = vmatprep.subr.mxu0 0.0
        %1591 = vmatpush1.msra.mxu0 0.0
        %1592 = vmatprep.subr.mxu0 0.0
        %1593 = vmatpush1.msra.mxu0 0.0
        %1594 = vmatprep.subr.mxu0 0.0
        %1595 = vmatpush1.msra.mxu0 0.0
        %1596 = vmatprep.subr.mxu0 0.0
        %1597 = vmatpush1.msra.mxu0 0.0
        %1598 = vmatprep.subr.mxu0 0.0
        %1599 = vmatpush1.msra.mxu0 0.0
        %1600 = vmatprep.mubr.f32.mxu0 0.0
        %1601 = vmatmul.mubr.f32.gmra.mrb[0].mxu0 %v1528
        %v1602 = vpop.f32.mrb[0].mxu0
        %v1603 = vadd.f32 0.0, %v1602
        %v1604 = vpop.f32.mrb[0].mxu0
        %v1605 = vadd.f32 0.0, %v1604
        %1606 = vdwg.mxu0
        %v1607 = vadd.f32 %v1523, %v1603
        %v1608 = vadd.f32 %v1525, %v1605
        %v1610 = vsel %vm298, %v535, 0
        %v1613 = vsel %vm302, %v696, 0
        %v1616 = vsel %vm302, %v697, 0
        %1618 = vmatprep.subr.mxu0 %v1616
        %1619 = vmatpush1.msra.mxu0 %v1613
        %1620 = vmatprep.subr.mxu0 0.0
        %1621 = vmatpush1.msra.mxu0 0.0
        %1622 = vmatprep.subr.mxu0 0.0
        %1623 = vmatpush1.msra.mxu0 0.0
        %1624 = vmatprep.subr.mxu0 0.0
        %1625 = vmatpush1.msra.mxu0 0.0
        %1626 = vmatprep.subr.mxu0 0.0
        %1627 = vmatpush1.msra.mxu0 0.0
        %1628 = vmatprep.subr.mxu0 0.0
        %1629 = vmatpush1.msra.mxu0 0.0
        %1630 = vmatprep.subr.mxu0 0.0
        %1631 = vmatpush1.msra.mxu0 0.0
        %1632 = vmatprep.subr.mxu0 0.0
        %1633 = vmatpush1.msra.mxu0 0.0
        %1634 = vmatprep.subr.mxu0 0.0
        %1635 = vmatpush1.msra.mxu0 0.0
        %1636 = vmatprep.subr.mxu0 0.0
        %1637 = vmatpush1.msra.mxu0 0.0
        %1638 = vmatprep.subr.mxu0 0.0
        %1639 = vmatpush1.msra.mxu0 0.0
        %1640 = vmatprep.subr.mxu0 0.0
        %1641 = vmatpush1.msra.mxu0 0.0
        %1642 = vmatprep.subr.mxu0 0.0
        %1643 = vmatpush1.msra.mxu0 0.0
        %1644 = vmatprep.subr.mxu0 0.0
        %1645 = vmatpush1.msra.mxu0 0.0
        %1646 = vmatprep.subr.mxu0 0.0
        %1647 = vmatpush1.msra.mxu0 0.0
        %1648 = vmatprep.subr.mxu0 0.0
        %1649 = vmatpush1.msra.mxu0 0.0
        %1650 = vmatprep.subr.mxu0 0.0
        %1651 = vmatpush1.msra.mxu0 0.0
        %1652 = vmatprep.subr.mxu0 0.0
        %1653 = vmatpush1.msra.mxu0 0.0
        %1654 = vmatprep.subr.mxu0 0.0
        %1655 = vmatpush1.msra.mxu0 0.0
        %1656 = vmatprep.subr.mxu0 0.0
        %1657 = vmatpush1.msra.mxu0 0.0
        %1658 = vmatprep.subr.mxu0 0.0
        %1659 = vmatpush1.msra.mxu0 0.0
        %1660 = vmatprep.subr.mxu0 0.0
        %1661 = vmatpush1.msra.mxu0 0.0
        %1662 = vmatprep.subr.mxu0 0.0
        %1663 = vmatpush1.msra.mxu0 0.0
        %1664 = vmatprep.subr.mxu0 0.0
        %1665 = vmatpush1.msra.mxu0 0.0
        %1666 = vmatprep.subr.mxu0 0.0
        %1667 = vmatpush1.msra.mxu0 0.0
        %1668 = vmatprep.subr.mxu0 0.0
        %1669 = vmatpush1.msra.mxu0 0.0
        %1670 = vmatprep.subr.mxu0 0.0
        %1671 = vmatpush1.msra.mxu0 0.0
        %1672 = vmatprep.subr.mxu0 0.0
        %1673 = vmatpush1.msra.mxu0 0.0
        %1674 = vmatprep.subr.mxu0 0.0
        %1675 = vmatpush1.msra.mxu0 0.0
        %1676 = vmatprep.subr.mxu0 0.0
        %1677 = vmatpush1.msra.mxu0 0.0
        %1678 = vmatprep.subr.mxu0 0.0
        %1679 = vmatpush1.msra.mxu0 0.0
        %1680 = vmatprep.subr.mxu0 0.0
        %1681 = vmatpush1.msra.mxu0 0.0
        %1682 = vmatprep.mubr.f32.mxu0 0.0
        %1683 = vmatmul.mubr.f32.gmra.mrb[0].mxu0 %v1610
        %v1684 = vpop.f32.mrb[0].mxu0
        %v1685 = vadd.f32 0.0, %v1684
        %v1686 = vpop.f32.mrb[0].mxu0
        %v1687 = vadd.f32 0.0, %v1686
        %1688 = vdwg.mxu0
        %v1689 = vadd.f32 %v1607, %v1685
        %v1690 = vadd.f32 %v1608, %v1687
        %v1691 = vld [vmem:[%s5] sm:$0xff]
        %1693 = vset.pattern.permute.xlu0 0
        %1694 = vperm.xlu0 %1693, %v1691
        %v1695 = vpop.permute.xlu0 %1694
        %v1697 = vadd.f32 %v1689, %v1695
        %v1698 = vadd.f32 %v1690, %v1695
        %v1699 = vmax.f32 %v1697, 0.0
        %v1700 = vmax.f32 %v1698, 0.0
        %s1701 = scalar_lea.vmem %s284, 32 [#allocation2]
        %1702 = vst [vmem:[%s1701] sm:$0xff] %v1699
        %1703 = vst [vmem:[%s1701 + $0x8] sm:$0xff] %v1700
        %v1705 = vsel %vm298, %v537, 0
        %1707 = vmatprep.subr.mxu0 %v1291
        %1708 = vmatpush1.msra.mxu0 %v1288
        %1709 = vmatprep.subr.mxu0 0.0
        %1710 = vmatpush1.msra.mxu0 0.0
        %1711 = vmatprep.subr.mxu0 0.0
        %1712 = vmatpush1.msra.mxu0 0.0
        %1713 = vmatprep.subr.mxu0 0.0
        %1714 = vmatpush1.msra.mxu0 0.0
        %1715 = vmatprep.subr.mxu0 0.0
        %1716 = vmatpush1.msra.mxu0 0.0
        %1717 = vmatprep.subr.mxu0 0.0
        %1718 = vmatpush1.msra.mxu0 0.0
        %1719 = vmatprep.subr.mxu0 0.0
        %1720 = vmatpush1.msra.mxu0 0.0
        %1721 = vmatprep.subr.mxu0 0.0
        %1722 = vmatpush1.msra.mxu0 0.0
        %1723 = vmatprep.subr.mxu0 0.0
        %1724 = vmatpush1.msra.mxu0 0.0
        %1725 = vmatprep.subr.mxu0 0.0
        %1726 = vmatpush1.msra.mxu0 0.0
        %1727 = vmatprep.subr.mxu0 0.0
        %1728 = vmatpush1.msra.mxu0 0.0
        %1729 = vmatprep.subr.mxu0 0.0
        %1730 = vmatpush1.msra.mxu0 0.0
        %1731 = vmatprep.subr.mxu0 0.0
        %1732 = vmatpush1.msra.mxu0 0.0
        %1733 = vmatprep.subr.mxu0 0.0
        %1734 = vmatpush1.msra.mxu0 0.0
        %1735 = vmatprep.subr.mxu0 0.0
        %1736 = vmatpush1.msra.mxu0 0.0
        %1737 = vmatprep.subr.mxu0 0.0
        %1738 = vmatpush1.msra.mxu0 0.0
        %1739 = vmatprep.subr.mxu0 0.0
        %1740 = vmatpush1.msra.mxu0 0.0
        %1741 = vmatprep.subr.mxu0 0.0
        %1742 = vmatpush1.msra.mxu0 0.0
        %1743 = vmatprep.subr.mxu0 0.0
        %1744 = vmatpush1.msra.mxu0 0.0
        %1745 = vmatprep.subr.mxu0 0.0
        %1746 = vmatpush1.msra.mxu0 0.0
        %1747 = vmatprep.subr.mxu0 0.0
        %1748 = vmatpush1.msra.mxu0 0.0
        %1749 = vmatprep.subr.mxu0 0.0
        %1750 = vmatpush1.msra.mxu0 0.0
        %1751 = vmatprep.subr.mxu0 0.0
        %1752 = vmatpush1.msra.mxu0 0.0
        %1753 = vmatprep.subr.mxu0 0.0
        %1754 = vmatpush1.msra.mxu0 0.0
        %1755 = vmatprep.subr.mxu0 0.0
        %1756 = vmatpush1.msra.mxu0 0.0
        %1757 = vmatprep.subr.mxu0 0.0
        %1758 = vmatpush1.msra.mxu0 0.0
        %1759 = vmatprep.subr.mxu0 0.0
        %1760 = vmatpush1.msra.mxu0 0.0
        %1761 = vmatprep.subr.mxu0 0.0
        %1762 = vmatpush1.msra.mxu0 0.0
        %1763 = vmatprep.subr.mxu0 0.0
        %1764 = vmatpush1.msra.mxu0 0.0
        %1765 = vmatprep.subr.mxu0 0.0
        %1766 = vmatpush1.msra.mxu0 0.0
        %1767 = vmatprep.subr.mxu0 0.0
        %1768 = vmatpush1.msra.mxu0 0.0
        %1769 = vmatprep.subr.mxu0 0.0
        %1770 = vmatpush1.msra.mxu0 0.0
        %1771 = vmatprep.mubr.f32.mxu0 0.0
        %1772 = vmatmul.mubr.f32.gmra.mrb[0].mxu0 %v1705
        %v1773 = vpop.f32.mrb[0].mxu0
        %v1774 = vadd.f32 0.0, %v1773
        %v1775 = vpop.f32.mrb[0].mxu0
        %v1776 = vadd.f32 0.0, %v1775
        %1777 = vdwg.mxu0
        %v1779 = vsel %vm298, %v536, 0
        %1781 = vmatprep.subr.mxu0 %v967
        %1782 = vmatpush1.msra.mxu0 %v965
        %1783 = vmatprep.subr.mxu0 0.0
        %1784 = vmatpush1.msra.mxu0 0.0
        %1785 = vmatprep.subr.mxu0 0.0
        %1786 = vmatpush1.msra.mxu0 0.0
        %1787 = vmatprep.subr.mxu0 0.0
        %1788 = vmatpush1.msra.mxu0 0.0
        %1789 = vmatprep.subr.mxu0 0.0
        %1790 = vmatpush1.msra.mxu0 0.0
        %1791 = vmatprep.subr.mxu0 0.0
        %1792 = vmatpush1.msra.mxu0 0.0
        %1793 = vmatprep.subr.mxu0 0.0
        %1794 = vmatpush1.msra.mxu0 0.0
        %1795 = vmatprep.subr.mxu0 0.0
        %1796 = vmatpush1.msra.mxu0 0.0
        %1797 = vmatprep.subr.mxu0 0.0
        %1798 = vmatpush1.msra.mxu0 0.0
        %1799 = vmatprep.subr.mxu0 0.0
        %1800 = vmatpush1.msra.mxu0 0.0
        %1801 = vmatprep.subr.mxu0 0.0
        %1802 = vmatpush1.msra.mxu0 0.0
        %1803 = vmatprep.subr.mxu0 0.0
        %1804 = vmatpush1.msra.mxu0 0.0
        %1805 = vmatprep.subr.mxu0 0.0
        %1806 = vmatpush1.msra.mxu0 0.0
        %1807 = vmatprep.subr.mxu0 0.0
        %1808 = vmatpush1.msra.mxu0 0.0
        %1809 = vmatprep.subr.mxu0 0.0
        %1810 = vmatpush1.msra.mxu0 0.0
        %1811 = vmatprep.subr.mxu0 0.0
        %1812 = vmatpush1.msra.mxu0 0.0
        %1813 = vmatprep.subr.mxu0 0.0
        %1814 = vmatpush1.msra.mxu0 0.0
        %1815 = vmatprep.subr.mxu0 0.0
        %1816 = vmatpush1.msra.mxu0 0.0
        %1817 = vmatprep.subr.mxu0 0.0
        %1818 = vmatpush1.msra.mxu0 0.0
        %1819 = vmatprep.subr.mxu0 0.0
        %1820 = vmatpush1.msra.mxu0 0.0
        %1821 = vmatprep.subr.mxu0 0.0
        %1822 = vmatpush1.msra.mxu0 0.0
        %1823 = vmatprep.subr.mxu0 0.0
        %1824 = vmatpush1.msra.mxu0 0.0
        %1825 = vmatprep.subr.mxu0 0.0
        %1826 = vmatpush1.msra.mxu0 0.0
        %1827 = vmatprep.subr.mxu0 0.0
        %1828 = vmatpush1.msra.mxu0 0.0
        %1829 = vmatprep.subr.mxu0 0.0
        %1830 = vmatpush1.msra.mxu0 0.0
        %1831 = vmatprep.subr.mxu0 0.0
        %1832 = vmatpush1.msra.mxu0 0.0
        %1833 = vmatprep.subr.mxu0 0.0
        %1834 = vmatpush1.msra.mxu0 0.0
        %1835 = vmatprep.subr.mxu0 0.0
        %1836 = vmatpush1.msra.mxu0 0.0
        %1837 = vmatprep.subr.mxu0 0.0
        %1838 = vmatpush1.msra.mxu0 0.0
        %1839 = vmatprep.subr.mxu0 0.0
        %1840 = vmatpush1.msra.mxu0 0.0
        %1841 = vmatprep.subr.mxu0 0.0
        %1842 = vmatpush1.msra.mxu0 0.0
        %1843 = vmatprep.subr.mxu0 0.0
        %1844 = vmatpush1.msra.mxu0 0.0
        %1845 = vmatprep.mubr.f32.mxu0 0.0
        %1846 = vmatmul.mubr.f32.gmra.mrb[0].mxu0 %v1779
        %v1847 = vpop.f32.mrb[0].mxu0
        %v1848 = vadd.f32 %v1774, %v1847
        %v1849 = vpop.f32.mrb[0].mxu0
        %v1850 = vadd.f32 %v1776, %v1849
        %1851 = vdwg.mxu0
        %v1853 = vsel %vm298, %v538, 0
        %1855 = vmatprep.subr.mxu0 %v1616
        %1856 = vmatpush1.msra.mxu0 %v1613
        %1857 = vmatprep.subr.mxu0 0.0
        %1858 = vmatpush1.msra.mxu0 0.0
        %1859 = vmatprep.subr.mxu0 0.0
        %1860 = vmatpush1.msra.mxu0 0.0
        %1861 = vmatprep.subr.mxu0 0.0
        %1862 = vmatpush1.msra.mxu0 0.0
        %1863 = vmatprep.subr.mxu0 0.0
        %1864 = vmatpush1.msra.mxu0 0.0
        %1865 = vmatprep.subr.mxu0 0.0
        %1866 = vmatpush1.msra.mxu0 0.0
        %1867 = vmatprep.subr.mxu0 0.0
        %1868 = vmatpush1.msra.mxu0 0.0
        %1869 = vmatprep.subr.mxu0 0.0
        %1870 = vmatpush1.msra.mxu0 0.0
        %1871 = vmatprep.subr.mxu0 0.0
        %1872 = vmatpush1.msra.mxu0 0.0
        %1873 = vmatprep.subr.mxu0 0.0
        %1874 = vmatpush1.msra.mxu0 0.0
        %1875 = vmatprep.subr.mxu0 0.0
        %1876 = vmatpush1.msra.mxu0 0.0
        %1877 = vmatprep.subr.mxu0 0.0
        %1878 = vmatpush1.msra.mxu0 0.0
        %1879 = vmatprep.subr.mxu0 0.0
        %1880 = vmatpush1.msra.mxu0 0.0
        %1881 = vmatprep.subr.mxu0 0.0
        %1882 = vmatpush1.msra.mxu0 0.0
        %1883 = vmatprep.subr.mxu0 0.0
        %1884 = vmatpush1.msra.mxu0 0.0
        %1885 = vmatprep.subr.mxu0 0.0
        %1886 = vmatpush1.msra.mxu0 0.0
        %1887 = vmatprep.subr.mxu0 0.0
        %1888 = vmatpush1.msra.mxu0 0.0
        %1889 = vmatprep.subr.mxu0 0.0
        %1890 = vmatpush1.msra.mxu0 0.0
        %1891 = vmatprep.subr.mxu0 0.0
        %1892 = vmatpush1.msra.mxu0 0.0
        %1893 = vmatprep.subr.mxu0 0.0
        %1894 = vmatpush1.msra.mxu0 0.0
        %1895 = vmatprep.subr.mxu0 0.0
        %1896 = vmatpush1.msra.mxu0 0.0
        %1897 = vmatprep.subr.mxu0 0.0
        %1898 = vmatpush1.msra.mxu0 0.0
        %1899 = vmatprep.subr.mxu0 0.0
        %1900 = vmatpush1.msra.mxu0 0.0
        %1901 = vmatprep.subr.mxu0 0.0
        %1902 = vmatpush1.msra.mxu0 0.0
        %1903 = vmatprep.subr.mxu0 0.0
        %1904 = vmatpush1.msra.mxu0 0.0
        %1905 = vmatprep.subr.mxu0 0.0
        %1906 = vmatpush1.msra.mxu0 0.0
        %1907 = vmatprep.subr.mxu0 0.0
        %1908 = vmatpush1.msra.mxu0 0.0
        %1909 = vmatprep.subr.mxu0 0.0
        %1910 = vmatpush1.msra.mxu0 0.0
        %1911 = vmatprep.subr.mxu0 0.0
        %1912 = vmatpush1.msra.mxu0 0.0
        %1913 = vmatprep.subr.mxu0 0.0
        %1914 = vmatpush1.msra.mxu0 0.0
        %1915 = vmatprep.subr.mxu0 0.0
        %1916 = vmatpush1.msra.mxu0 0.0
        %1917 = vmatprep.subr.mxu0 0.0
        %1918 = vmatpush1.msra.mxu0 0.0
        %1919 = vmatprep.mubr.f32.mxu0 0.0
        %1920 = vmatmul.mubr.f32.gmra.mrb[0].mxu0 %v1853
        %v1921 = vpop.f32.mrb[0].mxu0
        %v1922 = vadd.f32 0.0, %v1921
        %v1923 = vpop.f32.mrb[0].mxu0
        %v1924 = vadd.f32 0.0, %v1923
        %1925 = vdwg.mxu0
        %v1926 = vadd.f32 %v1848, %v1922
        %v1927 = vadd.f32 %v1850, %v1924
        %v1929 = vsel %vm298, %v539, 0
        %v1932 = vsel %vm302, %v718, 0
        %v1935 = vsel %vm302, %v719, 0
        %1937 = vmatprep.subr.mxu0 %v1935
        %1938 = vmatpush1.msra.mxu0 %v1932
        %1939 = vmatprep.subr.mxu0 0.0
        %1940 = vmatpush1.msra.mxu0 0.0
        %1941 = vmatprep.subr.mxu0 0.0
        %1942 = vmatpush1.msra.mxu0 0.0
        %1943 = vmatprep.subr.mxu0 0.0
        %1944 = vmatpush1.msra.mxu0 0.0
        %1945 = vmatprep.subr.mxu0 0.0
        %1946 = vmatpush1.msra.mxu0 0.0
        %1947 = vmatprep.subr.mxu0 0.0
        %1948 = vmatpush1.msra.mxu0 0.0
        %1949 = vmatprep.subr.mxu0 0.0
        %1950 = vmatpush1.msra.mxu0 0.0
        %1951 = vmatprep.subr.mxu0 0.0
        %1952 = vmatpush1.msra.mxu0 0.0
        %1953 = vmatprep.subr.mxu0 0.0
        %1954 = vmatpush1.msra.mxu0 0.0
        %1955 = vmatprep.subr.mxu0 0.0
        %1956 = vmatpush1.msra.mxu0 0.0
        %1957 = vmatprep.subr.mxu0 0.0
        %1958 = vmatpush1.msra.mxu0 0.0
        %1959 = vmatprep.subr.mxu0 0.0
        %1960 = vmatpush1.msra.mxu0 0.0
        %1961 = vmatprep.subr.mxu0 0.0
        %1962 = vmatpush1.msra.mxu0 0.0
        %1963 = vmatprep.subr.mxu0 0.0
        %1964 = vmatpush1.msra.mxu0 0.0
        %1965 = vmatprep.subr.mxu0 0.0
        %1966 = vmatpush1.msra.mxu0 0.0
        %1967 = vmatprep.subr.mxu0 0.0
        %1968 = vmatpush1.msra.mxu0 0.0
        %1969 = vmatprep.subr.mxu0 0.0
        %1970 = vmatpush1.msra.mxu0 0.0
        %1971 = vmatprep.subr.mxu0 0.0
        %1972 = vmatpush1.msra.mxu0 0.0
        %1973 = vmatprep.subr.mxu0 0.0
        %1974 = vmatpush1.msra.mxu0 0.0
        %1975 = vmatprep.subr.mxu0 0.0
        %1976 = vmatpush1.msra.mxu0 0.0
        %1977 = vmatprep.subr.mxu0 0.0
        %1978 = vmatpush1.msra.mxu0 0.0
        %1979 = vmatprep.subr.mxu0 0.0
        %1980 = vmatpush1.msra.mxu0 0.0
        %1981 = vmatprep.subr.mxu0 0.0
        %1982 = vmatpush1.msra.mxu0 0.0
        %1983 = vmatprep.subr.mxu0 0.0
        %1984 = vmatpush1.msra.mxu0 0.0
        %1985 = vmatprep.subr.mxu0 0.0
        %1986 = vmatpush1.msra.mxu0 0.0
        %1987 = vmatprep.subr.mxu0 0.0
        %1988 = vmatpush1.msra.mxu0 0.0
        %1989 = vmatprep.subr.mxu0 0.0
        %1990 = vmatpush1.msra.mxu0 0.0
        %1991 = vmatprep.subr.mxu0 0.0
        %1992 = vmatpush1.msra.mxu0 0.0
        %1993 = vmatprep.subr.mxu0 0.0
        %1994 = vmatpush1.msra.mxu0 0.0
        %1995 = vmatprep.subr.mxu0 0.0
        %1996 = vmatpush1.msra.mxu0 0.0
        %1997 = vmatprep.subr.mxu0 0.0
        %1998 = vmatpush1.msra.mxu0 0.0
        %1999 = vmatprep.subr.mxu0 0.0
        %2000 = vmatpush1.msra.mxu0 0.0
        %2001 = vmatprep.mubr.f32.mxu0 0.0
        %2002 = vmatmul.mubr.f32.gmra.mrb[0].mxu0 %v1929
        %v2003 = vpop.f32.mrb[0].mxu0
        %v2004 = vadd.f32 0.0, %v2003
        %v2005 = vpop.f32.mrb[0].mxu0
        %v2006 = vadd.f32 0.0, %v2005
        %2007 = vdwg.mxu0
        %v2008 = vadd.f32 %v1926, %v2004
        %v2009 = vadd.f32 %v1927, %v2006
        %v2010 = vld [vmem:[%s5] sm:$0xff]
        %2012 = vset.pattern.permute.xlu0 0
        %2013 = vperm.xlu0 %2012, %v2010
        %v2014 = vpop.permute.xlu0 %2013
        %v2016 = vadd.f32 %v2008, %v2014
        %v2017 = vadd.f32 %v2009, %v2014
        %v2018 = vmax.f32 %v2016, 0.0
        %v2019 = vmax.f32 %v2017, 0.0
        %s2020 = scalar_lea.vmem %s284, 48 [#allocation2]
        %2021 = vst [vmem:[%s2020] sm:$0xff] %v2018
        %2022 = vst [vmem:[%s2020 + $0x8] sm:$0xff] %v2019
        %s2023 = sand.u32 %s186, 1
        %s2024 = scalar_lea.sflag [#allocation3], %s2023
        %s2025 = sand.u32 %s186, 1
        %s2026 = smul.addr %s2025, 64
        %s2027 = scalar_lea.vmem [#allocation2], %s2026
        // Predicated region
        $region49: #{tpu_custom_call.1} parent=47 // pred_check
          %p2028 = pneg %p196
        $region50: #{tpu_custom_call.1} parent=47 // pred_check_branch
          %2030 = sbr.rel (%p2028) target = $region52
        $region51: #{tpu_custom_call.1} parent=47 // pred_region
          %s2032 = ssub.s32 1024, 1024
          %2033 = vsyncadd %s2024, %s2032
          %s2034 = smul.addr %s21, 8
          %s2035 = smul.addr %s2034, 128
          %s2036 = scalar_lea.hbm %s7, %s2035
          %s2037 = sshll.u32 %s2027, 4
          %s2038 = int_to_ptr.vmem [resolvable:$true] %s2037
          %2043 = dma.vmem_to_hbm [thread:$0]  %s2038, 1024, %s2036, %s2024, 256, 256, 16
        $region52: #{tpu_custom_call.1} parent=47 // pred_fallthru
          _
      $region48: #{tpu_custom_call.1} parent=5 // pred_fallthru
        _
      %p2044 = scmp.le.s32.totalorder 2, %s16
      // Predicated region
      $region53: #{tpu_custom_call.1} parent=5 // pred_check
        %p2045 = pneg %p2044
      $region54: #{tpu_custom_call.1} parent=5 // pred_check_branch
        %2047 = sbr.rel (%p2045) target = $region56
      $region55: #{tpu_custom_call.1} parent=5 // pred_region
        %s2048 = ssub.s32 %s16, 2
        // Predicated region
        $region57: #{tpu_custom_call.1} parent=55 // pred_check
          %p2049 = pneg %p202
        $region58: #{tpu_custom_call.1} parent=55 // pred_check_branch
          %2051 = sbr.rel (%p2049) target = $region60
        $region59: #{tpu_custom_call.1} parent=55 // pred_region
          %s2052 = sand.u32 %s187, 1
          %s2053 = scalar_lea.sflag [#allocation3], %s2052
          %s2054 = sand.u32 %s187, 1
          %s2055 = smul.addr %s2054, 64
          %s2056 = scalar_lea.vmem [#allocation2], %s2055
          %2057 = dma.done %s2053, 1024
        $region60: #{tpu_custom_call.1} parent=55 // pred_fallthru
          _
      $region56: #{tpu_custom_call.1} parent=5 // pred_fallthru
        _
    $region6: #{tpu_custom_call.1} parent=1 // loop_footer
      %s20 = sadd.s32 1, %s16
    $region7: #{tpu_custom_call.1} parent=1 // loop_footer_branch
      %15 = sbr.rel target = $region3
    $region8: #{tpu_custom_call.1} parent=1 // loop_exit
      _
    %2058 = vsyncpa [#allocation3], 1
    %s2059 = scalar_lea.sflag [#allocation3], 1
    %2060 = vsyncpa %s2059, 1

</llo_original>
